<compile_context>
chip_gen: v7x
topology: tpu7x:2x2x1
jax: 0.10.0
libtpu: 0.0.40
codegen_flags: <defaults>
</compile_context>

<pallas_src>
import functools

import numpy as np
import jax
import jax.numpy as jnp
from jax import lax
from jax.experimental import pallas as pl
from jax.experimental.pallas import tpu as pltpu


def _dense_block_kernel(x_ref, mask_ref, pool_ref, *rest,
                        L, K, W, C0p, Gp, lanes):
    """Fused DenseNet block + transition (batch folded into lanes).

    x_ref   : (C0p, N*H*W)        channel-padded input, lane-dense
    mask_ref: (K*K, N*H*W)        per-tap 0/1 zero-padding mask
    pool_ref: (N*H*W, N*Ho*Wo)    block-diagonal 2x2 average-pool matrix
    rest    : per layer (scale1, shift1, w1, scale2, shift2, w2) * L,
              transition (scale_t, shift_t, w_t),
              output ref (Ctp, N*Ho*Wo),
              scratch feature accumulator (C_total_pad, N*H*W) f32.
    """
    layer_refs = rest[:6 * L]
    st_ref, bt_ref, wt_ref = rest[6 * L:6 * L + 3]
    o_ref = rest[6 * L + 3]
    feat = rest[6 * L + 4]

    pad = (K - 1) // 2

    # Seed the feature accumulator with the (channel-padded) input.
    feat[0:C0p, :] = x_ref[...]

    for li in range(L):                       # L is small & static
        s1, b1, w1, s2, b2, w2 = layer_refs[6 * li:6 * (li + 1)]
        cin_p = C0p + li * Gp

        # BN1 + ReLU on the accumulated features, then 1x1 conv (one matmul).
        cur = feat[0:cin_p, :]                                    # (cin_p, lanes)
        a1 = jnp.maximum(cur * s1[...] + b1[...], 0.0)
        bott = jnp.dot(w1[...], a1.astype(w1.dtype),
                       preferred_element_type=jnp.float32)        # (Cmidp, lanes)

        # BN2 + ReLU.
        a2 = jnp.maximum(bott * s2[...] + b2[...], 0.0)

        # KxK 'same' conv as ONE fused im2col matmul.  Shifted taps via
        # pltpu.roll (XLU); per-tap mask zeroes out-of-image / cross-image lanes.
        parts = []
        t = 0
        for kh in range(K):
            for kw in range(K):
                d = (kh - pad) * W + (kw - pad)
                if d == 0:
                    parts.append(a2)
                else:
                    rolled = pltpu.roll(a2, (-d) % lanes, 1)
                    parts.append(rolled * mask_ref[t:t + 1, :])
                t += 1
        patches = jnp.concatenate(parts, axis=0)                  # (K*K*Cmidp, lanes)
        new_f = jnp.dot(w2[...], patches.astype(w2.dtype),
                        preferred_element_type=jnp.float32)       # (Gp, lanes)
        feat[cin_p:cin_p + Gp, :] = new_f

    # Transition: BN + ReLU + 1x1 conv + 2x2 avg-pool (block-diag pool matmul).
    at = jnp.maximum(feat[...] * st_ref[...] + bt_ref[...], 0.0)
    tr = jnp.dot(wt_ref[...], at.astype(wt_ref.dtype),
                 preferred_element_type=jnp.float32)              # (Ctp, lanes)
    o_ref[...] = jnp.dot(tr, pool_ref[...],
                         preferred_element_type=jnp.float32).astype(o_ref.dtype)


# ----------------------------- host-side helpers -----------------------------

def _round_up8(c):
    return ((c + 7) // 8) * 8


def _fold_bn(gamma, beta, mean, var, eps=1e-5):
    """Inference-mode BatchNorm folded to per-channel (scale, shift)."""
    scale = (gamma / jnp.sqrt(var + eps)).astype(jnp.float32)
    shift = (beta - mean * scale).astype(jnp.float32)
    return scale, shift


def _scatter_channels_1d(v, seg_starts, seg_sizes, total_pad):
    """Scatter a dense per-channel vector into the 8-aligned segment layout."""
    out = jnp.zeros((total_pad,), jnp.float32)
    off = 0
    for st, sz in zip(seg_starts, seg_sizes):
        out = out.at[st:st + sz].set(v[off:off + sz])
        off += sz
    return out[:, None]


def _scatter_in_channels(w, seg_starts, seg_sizes, total_pad):
    """Scatter a (Cout, Cin_dense) weight into padded input-channel columns."""
    out = jnp.zeros((w.shape[0], total_pad), jnp.float32)
    off = 0
    for st, sz in zip(seg_starts, seg_sizes):
        out = out.at[:, st:st + sz].set(w[:, off:off + sz])
        off += sz
    return out


def _pad_rows(w, rows_pad):
    return jnp.zeros((rows_pad, w.shape[1]), w.dtype).at[:w.shape[0]].set(w)


def dense_block_forward(x, layer_params, trans_params, *, kernel_size=3):
    """Pallas forward for DenseBlockTorch (defaults: is_first=False,
    is_last=False, drop_rate=0, eval-mode BatchNorm).  x is NCHW float32."""
    N, C0, H, W = x.shape
    K = kernel_size
    assert K % 2 == 1, "even kernel_size would mismatch PyTorch 'same' padding"
    pad = (K - 1) // 2
    L = len(layer_params)
    G = layer_params[0]["conv2_w"].shape[0]           # growth rate
    Cmid = layer_params[0]["conv2_w"].shape[1]        # bn_size * growth
    Ct = trans_params["conv_w"].shape[0]              # num_trans_out
    HW, Ho, Wo = H * W, H // 2, W // 2
    lanes, out_lanes = N * HW, N * Ho * Wo

    C0p, Gp, Cmidp, Ctp = map(_round_up8, (C0, G, Cmid, Ct))
    C_total_p = C0p + L * Gp
    seg_starts = [0] + [C0p + i * Gp for i in range(L)]
    seg_sizes = [C0] + [G] * L

    # ---- input: NCHW -> channel-major with batch folded into the lane axis ----
    x_l = jnp.transpose(x.reshape(N, C0, HW).astype(jnp.float32), (1, 0, 2))
    x_p = _pad_rows(x_l.reshape(C0, lanes), C0p)                   # (C0p, N*HW)

    # ---- host constants: per-tap padding mask + block-diagonal pool matrix ----
    yi, xi = np.arange(HW) // W, np.arange(HW) % W
    rows = []
    for kh in range(K):
        for kw in range(K):
            dy, dx = kh - pad, kw - pad
            m = ((yi + dy >= 0) & (yi + dy < H) &
                 (xi + dx >= 0) & (xi + dx < W)).astype(np.float32)
            rows.append(np.tile(m, N))
    tap_mask = jnp.asarray(np.stack(rows, 0))                      # (K*K, N*HW)

    yo, xo = np.arange(Ho * Wo) // Wo, np.arange(Ho * Wo) % Wo
    blk = ((yi[:, None] // 2 == yo[None, :]) &
           (xi[:, None] // 2 == xo[None, :])).astype(np.float32) * 0.25
    pool = np.zeros((lanes, out_lanes), np.float32)
    for n in range(N):
        pool[n * HW:(n + 1) * HW, n * Ho * Wo:(n + 1) * Ho * Wo] = blk
    pool_mat = jnp.asarray(pool)                                   # (N*HW, N*HoWo)

    # ---- fold BN, pad channels to 8-aligned segments, bf16 MXU weights ----
    args = [x_p, tap_mask, pool_mat]
    for i, lp in enumerate(layer_params):
        segs_s, segs_z = seg_starts[:i + 1], seg_sizes[:i + 1]
        cin_p = C0p + i * Gp

        s1, b1 = _fold_bn(lp["norm1_g"], lp["norm1_b"], lp["norm1_m"], lp["norm1_v"])
        s1 = _scatter_channels_1d(s1, segs_s, segs_z, cin_p)
        b1 = _scatter_channels_1d(b1, segs_s, segs_z, cin_p)
        w1 = lp["conv1_w"][:, :, 0, 0].astype(jnp.float32)         # (Cmid, Cin_i)
        w1 = _pad_rows(_scatter_in_channels(w1, segs_s, segs_z, cin_p),
                       Cmidp).astype(jnp.bfloat16)                 # (Cmidp, cin_p)

        s2, b2 = _fold_bn(lp["norm2_g"], lp["norm2_b"], lp["norm2_m"], lp["norm2_v"])
        s2 = _scatter_channels_1d(s2, [0], [Cmid], Cmidp)
        b2 = _scatter_channels_1d(b2, [0], [Cmid], Cmidp)
        w2 = jnp.transpose(lp["conv2_w"].astype(jnp.float32), (0, 2, 3, 1))  # (G,K,K,Cmid)
        w2 = jnp.zeros((G, K, K, Cmidp), jnp.float32).at[:, :, :, :Cmid].set(w2)
        w2 = _pad_rows(w2.reshape(G, K * K * Cmidp), Gp).astype(jnp.bfloat16)

        args += [s1, b1, w1, s2, b2, w2]

    st, bt = _fold_bn(trans_params["norm_g"], trans_params["norm_b"],
                      trans_params["norm_m"], trans_params["norm_v"])
    st = _scatter_channels_1d(st, seg_starts, seg_sizes, C_total_p)
    bt = _scatter_channels_1d(bt, seg_starts, seg_sizes, C_total_p)
    wt = trans_params["conv_w"][:, :, 0, 0].astype(jnp.float32)    # (Ct, C_total)
    wt = _pad_rows(_scatter_in_channels(wt, seg_starts, seg_sizes, C_total_p),
                   Ctp).astype(jnp.bfloat16)
    args += [st, bt, wt]

    kernel = functools.partial(_dense_block_kernel, L=L, K=K, W=W,
                               C0p=C0p, Gp=Gp, lanes=lanes)
    vmem = pl.BlockSpec(memory_space=pltpu.MemorySpace.VMEM)
    out = pl.pallas_call(
        kernel,
        out_shape=jax.ShapeDtypeStruct((Ctp, out_lanes), jnp.float32),
        in_specs=[vmem] * len(args),
        out_specs=vmem,
        scratch_shapes=[pltpu.VMEM((C_total_p, lanes), jnp.float32)],
    )(*args)

    # Un-pad channels, un-fold the batch from the lane axis -> NCHW.
    return jnp.transpose(out[:Ct].reshape(Ct, N, Ho, Wo), (1, 0, 2, 3))


if __name__ == "__main__":
    # DenseBlockTorch(num_init_features=4, growth_rate=4, num_layers=2,
    #                 kernel_size=3, bn_size=2) with default is_first/is_last.
    N, C0, H, W = 2, 4, 16, 16
    G, L, K, BN_SIZE = 4, 2, 3, 2
    Cmid = BN_SIZE * G
    Ct = G                          # num_trans_out defaults to growth_rate
    C_total = C0 + L * G
    eps = 1e-5

    key = jax.random.PRNGKey(0)
    keys = jax.random.split(key, 16)

    def bn_params(k, c):
        k1, k2, k3, k4 = jax.random.split(k, 4)
        return (1.0 + 0.1 * jax.random.normal(k1, (c,), jnp.float32),
                0.1 * jax.random.normal(k2, (c,), jnp.float32),
                0.1 * jax.random.normal(k3, (c,), jnp.float32),
                jax.random.uniform(k4, (c,), jnp.float32, 0.5, 1.5))

    def conv_w(k, cout, cin, ksz):
        fan_in = cin * ksz * ksz
        return jax.random.normal(k, (cout, cin, ksz, ksz), jnp.float32) * (2.0 / fan_in) ** 0.5

    x = jax.random.normal(keys[0], (N, C0, H, W), jnp.float32)

    layer_params = []
    ki = 1
    for i in range(L):
        cin_i = C0 + i * G
        g1, b1, m1, v1 = bn_params(keys[ki], cin_i); ki += 1
        w1 = conv_w(keys[ki], Cmid, cin_i, 1); ki += 1
        g2, b2, m2, v2 = bn_params(keys[ki], Cmid); ki += 1
        w2 = conv_w(keys[ki], G, Cmid, K); ki += 1
        layer_params.append(dict(norm1_g=g1, norm1_b=b1, norm1_m=m1, norm1_v=v1,
                                 conv1_w=w1,
                                 norm2_g=g2, norm2_b=b2, norm2_m=m2, norm2_v=v2,
                                 conv2_w=w2))
    gt, btr, mt, vt = bn_params(keys[ki], C_total); ki += 1
    wt = conv_w(keys[ki], Ct, C_total, 1); ki += 1
    trans_params = dict(norm_g=gt, norm_b=btr, norm_m=mt, norm_v=vt, conv_w=wt)

    out = dense_block_forward(x, layer_params, trans_params, kernel_size=K)
    out = jax.block_until_ready(out)
    assert out.shape == (N, Ct, H // 2, W // 2)

    # ---- pure-JAX reference (inference-mode BN), NCHW, f32 HIGHEST ----
    def bn(t, g, b, m, v):
        inv = g / jnp.sqrt(v + eps)
        return t * inv[None, :, None, None] + (b - m * inv)[None, :, None, None]

    def conv(t, w, p):
        return lax.conv_general_dilated(
            t, w, (1, 1), ((p, p), (p, p)),
            dimension_numbers=("NCHW", "OIHW", "NCHW"),
            precision=lax.Precision.HIGHEST)

    feats = [x]
    for lp in layer_params:
        cat = jnp.concatenate(feats, axis=1)
        a1 = jax.nn.relu(bn(cat, lp["norm1_g"], lp["norm1_b"], lp["norm1_m"], lp["norm1_v"]))
        bott = conv(a1, lp["conv1_w"], 0)
        a2 = jax.nn.relu(bn(bott, lp["norm2_g"], lp["norm2_b"], lp["norm2_m"], lp["norm2_v"]))
        feats.append(conv(a2, lp["conv2_w"], (K - 1) // 2))
    cat = jnp.concatenate(feats, axis=1)
    at = jax.nn.relu(bn(cat, gt, btr, mt, vt))
    tr = conv(at, wt, 0)
    ref = tr.reshape(N, Ct, H // 2, 2, W // 2, 2).mean(axis=(3, 5))

    # Tolerance accounts for bf16 MXU operands (f32 accumulation) vs the f32
    # HIGHEST-precision reference.
    assert jnp.allclose(out, ref, atol=5e-2, rtol=5e-2), \
        float(jnp.max(jnp.abs(out - ref)))
    print("KERNEL_OK")
</pallas_src>

<mosaic_0001>
module attributes {stable_mosaic.version = 11 : i64} {
  func.func @_dense_block_kernel(%arg0: memref<8x512xf32, #tpu.memory_space<vmem>>, %arg1: memref<9x512xf32, #tpu.memory_space<vmem>>, %arg2: memref<512x128xf32, #tpu.memory_space<vmem>>, %arg3: memref<8x1xf32, #tpu.memory_space<vmem>>, %arg4: memref<8x1xf32, #tpu.memory_space<vmem>>, %arg5: memref<8x8xbf16, #tpu.memory_space<vmem>>, %arg6: memref<8x1xf32, #tpu.memory_space<vmem>>, %arg7: memref<8x1xf32, #tpu.memory_space<vmem>>, %arg8: memref<8x72xbf16, #tpu.memory_space<vmem>>, %arg9: memref<16x1xf32, #tpu.memory_space<vmem>>, %arg10: memref<16x1xf32, #tpu.memory_space<vmem>>, %arg11: memref<8x16xbf16, #tpu.memory_space<vmem>>, %arg12: memref<8x1xf32, #tpu.memory_space<vmem>>, %arg13: memref<8x1xf32, #tpu.memory_space<vmem>>, %arg14: memref<8x72xbf16, #tpu.memory_space<vmem>>, %arg15: memref<24x1xf32, #tpu.memory_space<vmem>>, %arg16: memref<24x1xf32, #tpu.memory_space<vmem>>, %arg17: memref<8x24xbf16, #tpu.memory_space<vmem>>, %arg18: memref<8x128xf32, #tpu.memory_space<vmem>>, %arg19: memref<24x512xf32, #tpu.memory_space<vmem>>) attributes {dimension_semantics = [], scalar_prefetch = 0 : i64, scratch_operands = 1 : i64, tpu.core_type = #tpu.core_type<tc>} {
    %c0 = arith.constant 0 : index
    %c0_0 = arith.constant 0 : index
    %0 = vector.load %arg0[%c0, %c0_0] : memref<8x512xf32, #tpu.memory_space<vmem>>, vector<8x512xf32>
    %c0_1 = arith.constant 0 : index
    %c0_2 = arith.constant 0 : index
    %1 = vector.load %arg19[%c0_1, %c0_2] : memref<24x512xf32, #tpu.memory_space<vmem>>, vector<8x512xf32>
    tpu.vector_store %arg19[%c0_1, %c0_2], %0 {strides = array<i32>} : memref<24x512xf32, #tpu.memory_space<vmem>>, vector<8x512xf32>,
    %c0_3 = arith.constant 0 : index
    %c0_4 = arith.constant 0 : index
    %2 = vector.load %arg19[%c0_3, %c0_4] : memref<24x512xf32, #tpu.memory_space<vmem>>, vector<8x512xf32>
    %c0_5 = arith.constant 0 : index
    %c0_6 = arith.constant 0 : index
    %3 = vector.load %arg3[%c0_5, %c0_6] : memref<8x1xf32, #tpu.memory_space<vmem>>, vector<8x1xf32>
    %4 = vector.broadcast %3 : vector<8x1xf32> to vector<8x512xf32>
    %5 = arith.mulf %2, %4 : vector<8x512xf32>
    %c0_7 = arith.constant 0 : index
    %c0_8 = arith.constant 0 : index
    %6 = vector.load %arg4[%c0_7, %c0_8] : memref<8x1xf32, #tpu.memory_space<vmem>>, vector<8x1xf32>
    %7 = vector.broadcast %6 : vector<8x1xf32> to vector<8x512xf32>
    %8 = arith.addf %5, %7 : vector<8x512xf32>
    %cst = arith.constant 0.000000e+00 : f32
    %9 = vector.broadcast %cst : f32 to vector<8x512xf32>
    %10 = arith.maximumf %8, %9 : vector<8x512xf32>
    %c0_9 = arith.constant 0 : index
    %c0_10 = arith.constant 0 : index
    %11 = vector.load %arg5[%c0_9, %c0_10] : memref<8x8xbf16, #tpu.memory_space<vmem>>, vector<8x8xbf16>
    %12 = arith.truncf %10 : vector<8x512xf32> to vector<8x512xbf16>
    %cst_11 = arith.constant dense<0.000000e+00> : vector<8x512xf32>
    %13 = tpu.matmul %11, %12, %cst_11 {dimension_numbers = #tpu.dot_dimension_numbers<[1], [0], [0], [1], [0, 0, 1, 1], [], []>} : vector<8x8xbf16>, vector<8x512xbf16>, vector<8x512xf32> -> vector<8x512xf32>
    %c0_12 = arith.constant 0 : index
    %c0_13 = arith.constant 0 : index
    %14 = vector.load %arg6[%c0_12, %c0_13] : memref<8x1xf32, #tpu.memory_space<vmem>>, vector<8x1xf32>
    %15 = vector.broadcast %14 : vector<8x1xf32> to vector<8x512xf32>
    %16 = arith.mulf %13, %15 : vector<8x512xf32>
    %c0_14 = arith.constant 0 : index
    %c0_15 = arith.constant 0 : index
    %17 = vector.load %arg7[%c0_14, %c0_15] : memref<8x1xf32, #tpu.memory_space<vmem>>, vector<8x1xf32>
    %18 = vector.broadcast %17 : vector<8x1xf32> to vector<8x512xf32>
    %19 = arith.addf %16, %18 : vector<8x512xf32>
    %cst_16 = arith.constant 0.000000e+00 : f32
    %20 = vector.broadcast %cst_16 : f32 to vector<8x512xf32>
    %21 = arith.maximumf %19, %20 : vector<8x512xf32>
    %c17_i32 = arith.constant 17 : i32
    %22 = tpu.dynamic_rotate %21 by %c17_i32 dim 1 : vector<8x512xf32>, i32 -> vector<8x512xf32>
    %c0_17 = arith.constant 0 : index
    %c0_18 = arith.constant 0 : index
    %23 = vector.load %arg1[%c0_17, %c0_18] : memref<9x512xf32, #tpu.memory_space<vmem>>, vector<1x512xf32>
    %24 = vector.broadcast %23 : vector<1x512xf32> to vector<8x512xf32>
    %25 = arith.mulf %22, %24 : vector<8x512xf32>
    %c16_i32 = arith.constant 16 : i32
    %26 = tpu.dynamic_rotate %21 by %c16_i32 dim 1 : vector<8x512xf32>, i32 -> vector<8x512xf32>
    %c1 = arith.constant 1 : index
    %c0_19 = arith.constant 0 : index
    %27 = vector.load %arg1[%c1, %c0_19] : memref<9x512xf32, #tpu.memory_space<vmem>>, vector<1x512xf32>
    %28 = vector.broadcast %27 : vector<1x512xf32> to vector<8x512xf32>
    %29 = arith.mulf %26, %28 : vector<8x512xf32>
    %c15_i32 = arith.constant 15 : i32
    %30 = tpu.dynamic_rotate %21 by %c15_i32 dim 1 : vector<8x512xf32>, i32 -> vector<8x512xf32>
    %c2 = arith.constant 2 : index
    %c0_20 = arith.constant 0 : index
    %31 = vector.load %arg1[%c2, %c0_20] : memref<9x512xf32, #tpu.memory_space<vmem>>, vector<1x512xf32>
    %32 = vector.broadcast %31 : vector<1x512xf32> to vector<8x512xf32>
    %33 = arith.mulf %30, %32 : vector<8x512xf32>
    %c1_i32 = arith.constant 1 : i32
    %34 = tpu.dynamic_rotate %21 by %c1_i32 dim 1 : vector<8x512xf32>, i32 -> vector<8x512xf32>
    %c3 = arith.constant 3 : index
    %c0_21 = arith.constant 0 : index
    %35 = vector.load %arg1[%c3, %c0_21] : memref<9x512xf32, #tpu.memory_space<vmem>>, vector<1x512xf32>
    %36 = vector.broadcast %35 : vector<1x512xf32> to vector<8x512xf32>
    %37 = arith.mulf %34, %36 : vector<8x512xf32>
    %c511_i32 = arith.constant 511 : i32
    %38 = tpu.dynamic_rotate %21 by %c511_i32 dim 1 : vector<8x512xf32>, i32 -> vector<8x512xf32>
    %c5 = arith.constant 5 : index
    %c0_22 = arith.constant 0 : index
    %39 = vector.load %arg1[%c5, %c0_22] : memref<9x512xf32, #tpu.memory_space<vmem>>, vector<1x512xf32>
    %40 = vector.broadcast %39 : vector<1x512xf32> to vector<8x512xf32>
    %41 = arith.mulf %38, %40 : vector<8x512xf32>
    %c497_i32 = arith.constant 497 : i32
    %42 = tpu.dynamic_rotate %21 by %c497_i32 dim 1 : vector<8x512xf32>, i32 -> vector<8x512xf32>
    %c6 = arith.constant 6 : index
    %c0_23 = arith.constant 0 : index
    %43 = vector.load %arg1[%c6, %c0_23] : memref<9x512xf32, #tpu.memory_space<vmem>>, vector<1x512xf32>
    %44 = vector.broadcast %43 : vector<1x512xf32> to vector<8x512xf32>
    %45 = arith.mulf %42, %44 : vector<8x512xf32>
    %c496_i32 = arith.constant 496 : i32
    %46 = tpu.dynamic_rotate %21 by %c496_i32 dim 1 : vector<8x512xf32>, i32 -> vector<8x512xf32>
    %c7 = arith.constant 7 : index
    %c0_24 = arith.constant 0 : index
    %47 = vector.load %arg1[%c7, %c0_24] : memref<9x512xf32, #tpu.memory_space<vmem>>, vector<1x512xf32>
    %48 = vector.broadcast %47 : vector<1x512xf32> to vector<8x512xf32>
    %49 = arith.mulf %46, %48 : vector<8x512xf32>
    %c495_i32 = arith.constant 495 : i32
    %50 = tpu.dynamic_rotate %21 by %c495_i32 dim 1 : vector<8x512xf32>, i32 -> vector<8x512xf32>
    %c8 = arith.constant 8 : index
    %c0_25 = arith.constant 0 : index
    %51 = vector.load %arg1[%c8, %c0_25] : memref<9x512xf32, #tpu.memory_space<vmem>>, vector<1x512xf32>
    %52 = vector.broadcast %51 : vector<1x512xf32> to vector<8x512xf32>
    %53 = arith.mulf %50, %52 : vector<8x512xf32>
    %54 = tpu.concatenate %25, %29, %33, %37, %21, %41, %45, %49, %53 in 0 : vector<8x512xf32>, vector<8x512xf32>, vector<8x512xf32>, vector<8x512xf32>, vector<8x512xf32>, vector<8x512xf32>, vector<8x512xf32>, vector<8x512xf32>, vector<8x512xf32> -> vector<72x512xf32>
    %c0_26 = arith.constant 0 : index
    %c0_27 = arith.constant 0 : index
    %55 = vector.load %arg8[%c0_26, %c0_27] : memref<8x72xbf16, #tpu.memory_space<vmem>>, vector<8x72xbf16>
    %56 = arith.truncf %54 : vector<72x512xf32> to vector<72x512xbf16>
    %cst_28 = arith.constant dense<0.000000e+00> : vector<8x512xf32>
    %57 = tpu.matmul %55, %56, %cst_28 {dimension_numbers = #tpu.dot_dimension_numbers<[1], [0], [0], [1], [0, 0, 1, 1], [], []>} : vector<8x72xbf16>, vector<72x512xbf16>, vector<8x512xf32> -> vector<8x512xf32>
    %c8_29 = arith.constant 8 : index
    %c0_30 = arith.constant 0 : index
    %58 = vector.load %arg19[%c8_29, %c0_30] : memref<24x512xf32, #tpu.memory_space<vmem>>, vector<8x512xf32>
    tpu.vector_store %arg19[%c8_29, %c0_30], %57 {strides = array<i32>} : memref<24x512xf32, #tpu.memory_space<vmem>>, vector<8x512xf32>,
    %c0_31 = arith.constant 0 : index
    %c0_32 = arith.constant 0 : index
    %59 = vector.load %arg19[%c0_31, %c0_32] : memref<24x512xf32, #tpu.memory_space<vmem>>, vector<16x512xf32>
    %c0_33 = arith.constant 0 : index
    %c0_34 = arith.constant 0 : index
    %60 = vector.load %arg9[%c0_33, %c0_34] : memref<16x1xf32, #tpu.memory_space<vmem>>, vector<16x1xf32>
    %61 = vector.broadcast %60 : vector<16x1xf32> to vector<16x512xf32>
    %62 = arith.mulf %59, %61 : vector<16x512xf32>
    %c0_35 = arith.constant 0 : index
    %c0_36 = arith.constant 0 : index
    %63 = vector.load %arg10[%c0_35, %c0_36] : memref<16x1xf32, #tpu.memory_space<vmem>>, vector<16x1xf32>
    %64 = vector.broadcast %63 : vector<16x1xf32> to vector<16x512xf32>
    %65 = arith.addf %62, %64 : vector<16x512xf32>
    %cst_37 = arith.constant 0.000000e+00 : f32
    %66 = vector.broadcast %cst_37 : f32 to vector<16x512xf32>
    %67 = arith.maximumf %65, %66 : vector<16x512xf32>
    %c0_38 = arith.constant 0 : index
    %c0_39 = arith.constant 0 : index
    %68 = vector.load %arg11[%c0_38, %c0_39] : memref<8x16xbf16, #tpu.memory_space<vmem>>, vector<8x16xbf16>
    %69 = arith.truncf %67 : vector<16x512xf32> to vector<16x512xbf16>
    %cst_40 = arith.constant dense<0.000000e+00> : vector<8x512xf32>
    %70 = tpu.matmul %68, %69, %cst_40 {dimension_numbers = #tpu.dot_dimension_numbers<[1], [0], [0], [1], [0, 0, 1, 1], [], []>} : vector<8x16xbf16>, vector<16x512xbf16>, vector<8x512xf32> -> vector<8x512xf32>
    %c0_41 = arith.constant 0 : index
    %c0_42 = arith.constant 0 : index
    %71 = vector.load %arg12[%c0_41, %c0_42] : memref<8x1xf32, #tpu.memory_space<vmem>>, vector<8x1xf32>
    %72 = vector.broadcast %71 : vector<8x1xf32> to vector<8x512xf32>
    %73 = arith.mulf %70, %72 : vector<8x512xf32>
    %c0_43 = arith.constant 0 : index
    %c0_44 = arith.constant 0 : index
    %74 = vector.load %arg13[%c0_43, %c0_44] : memref<8x1xf32, #tpu.memory_space<vmem>>, vector<8x1xf32>
    %75 = vector.broadcast %74 : vector<8x1xf32> to vector<8x512xf32>
    %76 = arith.addf %73, %75 : vector<8x512xf32>
    %cst_45 = arith.constant 0.000000e+00 : f32
    %77 = vector.broadcast %cst_45 : f32 to vector<8x512xf32>
    %78 = arith.maximumf %76, %77 : vector<8x512xf32>
    %c17_i32_46 = arith.constant 17 : i32
    %79 = tpu.dynamic_rotate %78 by %c17_i32_46 dim 1 : vector<8x512xf32>, i32 -> vector<8x512xf32>
    %c0_47 = arith.constant 0 : index
    %c0_48 = arith.constant 0 : index
    %80 = vector.load %arg1[%c0_47, %c0_48] : memref<9x512xf32, #tpu.memory_space<vmem>>, vector<1x512xf32>
    %81 = vector.broadcast %80 : vector<1x512xf32> to vector<8x512xf32>
    %82 = arith.mulf %79, %81 : vector<8x512xf32>
    %c16_i32_49 = arith.constant 16 : i32
    %83 = tpu.dynamic_rotate %78 by %c16_i32_49 dim 1 : vector<8x512xf32>, i32 -> vector<8x512xf32>
    %c1_50 = arith.constant 1 : index
    %c0_51 = arith.constant 0 : index
    %84 = vector.load %arg1[%c1_50, %c0_51] : memref<9x512xf32, #tpu.memory_space<vmem>>, vector<1x512xf32>
    %85 = vector.broadcast %84 : vector<1x512xf32> to vector<8x512xf32>
    %86 = arith.mulf %83, %85 : vector<8x512xf32>
    %c15_i32_52 = arith.constant 15 : i32
    %87 = tpu.dynamic_rotate %78 by %c15_i32_52 dim 1 : vector<8x512xf32>, i32 -> vector<8x512xf32>
    %c2_53 = arith.constant 2 : index
    %c0_54 = arith.constant 0 : index
    %88 = vector.load %arg1[%c2_53, %c0_54] : memref<9x512xf32, #tpu.memory_space<vmem>>, vector<1x512xf32>
    %89 = vector.broadcast %88 : vector<1x512xf32> to vector<8x512xf32>
    %90 = arith.mulf %87, %89 : vector<8x512xf32>
    %c1_i32_55 = arith.constant 1 : i32
    %91 = tpu.dynamic_rotate %78 by %c1_i32_55 dim 1 : vector<8x512xf32>, i32 -> vector<8x512xf32>
    %c3_56 = arith.constant 3 : index
    %c0_57 = arith.constant 0 : index
    %92 = vector.load %arg1[%c3_56, %c0_57] : memref<9x512xf32, #tpu.memory_space<vmem>>, vector<1x512xf32>
    %93 = vector.broadcast %92 : vector<1x512xf32> to vector<8x512xf32>
    %94 = arith.mulf %91, %93 : vector<8x512xf32>
    %c511_i32_58 = arith.constant 511 : i32
    %95 = tpu.dynamic_rotate %78 by %c511_i32_58 dim 1 : vector<8x512xf32>, i32 -> vector<8x512xf32>
    %c5_59 = arith.constant 5 : index
    %c0_60 = arith.constant 0 : index
    %96 = vector.load %arg1[%c5_59, %c0_60] : memref<9x512xf32, #tpu.memory_space<vmem>>, vector<1x512xf32>
    %97 = vector.broadcast %96 : vector<1x512xf32> to vector<8x512xf32>
    %98 = arith.mulf %95, %97 : vector<8x512xf32>
    %c497_i32_61 = arith.constant 497 : i32
    %99 = tpu.dynamic_rotate %78 by %c497_i32_61 dim 1 : vector<8x512xf32>, i32 -> vector<8x512xf32>
    %c6_62 = arith.constant 6 : index
    %c0_63 = arith.constant 0 : index
    %100 = vector.load %arg1[%c6_62, %c0_63] : memref<9x512xf32, #tpu.memory_space<vmem>>, vector<1x512xf32>
    %101 = vector.broadcast %100 : vector<1x512xf32> to vector<8x512xf32>
    %102 = arith.mulf %99, %101 : vector<8x512xf32>
    %c496_i32_64 = arith.constant 496 : i32
    %103 = tpu.dynamic_rotate %78 by %c496_i32_64 dim 1 : vector<8x512xf32>, i32 -> vector<8x512xf32>
    %c7_65 = arith.constant 7 : index
    %c0_66 = arith.constant 0 : index
    %104 = vector.load %arg1[%c7_65, %c0_66] : memref<9x512xf32, #tpu.memory_space<vmem>>, vector<1x512xf32>
    %105 = vector.broadcast %104 : vector<1x512xf32> to vector<8x512xf32>
    %106 = arith.mulf %103, %105 : vector<8x512xf32>
    %c495_i32_67 = arith.constant 495 : i32
    %107 = tpu.dynamic_rotate %78 by %c495_i32_67 dim 1 : vector<8x512xf32>, i32 -> vector<8x512xf32>
    %c8_68 = arith.constant 8 : index
    %c0_69 = arith.constant 0 : index
    %108 = vector.load %arg1[%c8_68, %c0_69] : memref<9x512xf32, #tpu.memory_space<vmem>>, vector<1x512xf32>
    %109 = vector.broadcast %108 : vector<1x512xf32> to vector<8x512xf32>
    %110 = arith.mulf %107, %109 : vector<8x512xf32>
    %111 = tpu.concatenate %82, %86, %90, %94, %78, %98, %102, %106, %110 in 0 : vector<8x512xf32>, vector<8x512xf32>, vector<8x512xf32>, vector<8x512xf32>, vector<8x512xf32>, vector<8x512xf32>, vector<8x512xf32>, vector<8x512xf32>, vector<8x512xf32> -> vector<72x512xf32>
    %c0_70 = arith.constant 0 : index
    %c0_71 = arith.constant 0 : index
    %112 = vector.load %arg14[%c0_70, %c0_71] : memref<8x72xbf16, #tpu.memory_space<vmem>>, vector<8x72xbf16>
    %113 = arith.truncf %111 : vector<72x512xf32> to vector<72x512xbf16>
    %cst_72 = arith.constant dense<0.000000e+00> : vector<8x512xf32>
    %114 = tpu.matmul %112, %113, %cst_72 {dimension_numbers = #tpu.dot_dimension_numbers<[1], [0], [0], [1], [0, 0, 1, 1], [], []>} : vector<8x72xbf16>, vector<72x512xbf16>, vector<8x512xf32> -> vector<8x512xf32>
    %c16 = arith.constant 16 : index
    %c0_73 = arith.constant 0 : index
    %115 = vector.load %arg19[%c16, %c0_73] : memref<24x512xf32, #tpu.memory_space<vmem>>, vector<8x512xf32>
    tpu.vector_store %arg19[%c16, %c0_73], %114 {strides = array<i32>} : memref<24x512xf32, #tpu.memory_space<vmem>>, vector<8x512xf32>,
    %c0_74 = arith.constant 0 : index
    %c0_75 = arith.constant 0 : index
    %116 = vector.load %arg19[%c0_74, %c0_75] : memref<24x512xf32, #tpu.memory_space<vmem>>, vector<24x512xf32>
    %c0_76 = arith.constant 0 : index
    %c0_77 = arith.constant 0 : index
    %117 = vector.load %arg15[%c0_76, %c0_77] : memref<24x1xf32, #tpu.memory_space<vmem>>, vector<24x1xf32>
    %118 = vector.broadcast %117 : vector<24x1xf32> to vector<24x512xf32>
    %119 = arith.mulf %116, %118 : vector<24x512xf32>
    %c0_78 = arith.constant 0 : index
    %c0_79 = arith.constant 0 : index
    %120 = vector.load %arg16[%c0_78, %c0_79] : memref<24x1xf32, #tpu.memory_space<vmem>>, vector<24x1xf32>
    %121 = vector.broadcast %120 : vector<24x1xf32> to vector<24x512xf32>
    %122 = arith.addf %119, %121 : vector<24x512xf32>
    %cst_80 = arith.constant 0.000000e+00 : f32
    %123 = vector.broadcast %cst_80 : f32 to vector<24x512xf32>
    %124 = arith.maximumf %122, %123 : vector<24x512xf32>
    %c0_81 = arith.constant 0 : index
    %c0_82 = arith.constant 0 : index
    %125 = vector.load %arg17[%c0_81, %c0_82] : memref<8x24xbf16, #tpu.memory_space<vmem>>, vector<8x24xbf16>
    %126 = arith.truncf %124 : vector<24x512xf32> to vector<24x512xbf16>
    %cst_83 = arith.constant dense<0.000000e+00> : vector<8x512xf32>
    %127 = tpu.matmul %125, %126, %cst_83 {dimension_numbers = #tpu.dot_dimension_numbers<[1], [0], [0], [1], [0, 0, 1, 1], [], []>} : vector<8x24xbf16>, vector<24x512xbf16>, vector<8x512xf32> -> vector<8x512xf32>
    %c0_84 = arith.constant 0 : index
    %c0_85 = arith.constant 0 : index
    %128 = vector.load %arg2[%c0_84, %c0_85] : memref<512x128xf32, #tpu.memory_space<vmem>>, vector<512x128xf32>
    %cst_86 = arith.constant dense<0.000000e+00> : vector<8x128xf32>
    %129 = tpu.matmul %127, %128, %cst_86 {dimension_numbers = #tpu.dot_dimension_numbers<[1], [0], [0], [1], [0, 0, 1, 1], [], []>} : vector<8x512xf32>, vector<512x128xf32>, vector<8x128xf32> -> vector<8x128xf32>
    %c0_87 = arith.constant 0 : index
    %c0_88 = arith.constant 0 : index
    %130 = vector.load %arg18[%c0_87, %c0_88] : memref<8x128xf32, #tpu.memory_space<vmem>>, vector<8x128xf32>
    tpu.vector_store %arg18[%c0_87, %c0_88], %129 {strides = array<i32>} : memref<8x128xf32, #tpu.memory_space<vmem>>, vector<8x128xf32>,
    return
  }
}

</mosaic_0001>

<llo_original>
// kernel: tpu_custom_call.1
$region0: #{tpu_custom_call.1}
  #allocation0 [shape = 'u32[]', space=smem, size = 0x4, offset = 0x4, fixed_abs, tag = 'smem constant byte address 0x4 - core index']
  #allocation1 [shape = 'u32[144,128]{1,0:T(1,128)}', space=vmem, size = 0x12000, scoped, tag = 'internal scratch']
  #allocation2 [shape = 'f32[24,512]{1,0:T(8,128)}', space=vmem, size = 0xc000, scoped, tag = 'scratch operand']
  %s0 = inlined_call_operand.vmem [shape: f32[8,512], index: 0, kind: input, shape index: {}]
  %s1 = inlined_call_operand.vmem [shape: f32[9,512], index: 1, kind: input, shape index: {}]
  %s2 = inlined_call_operand.hbm [shape: f32[512,128], index: 2, kind: input, shape index: {}]
  %s3 = inlined_call_operand.vmem [shape: f32[8,1], index: 3, kind: input, shape index: {}]
  %s4 = inlined_call_operand.vmem [shape: f32[8,1], index: 4, kind: input, shape index: {}]
  %s5 = inlined_call_operand.vmem [shape: bf16[8,8], index: 5, kind: input, shape index: {}]
  %s6 = inlined_call_operand.vmem [shape: f32[8,1], index: 6, kind: input, shape index: {}]
  %s7 = inlined_call_operand.vmem [shape: f32[8,1], index: 7, kind: input, shape index: {}]
  %s8 = inlined_call_operand.vmem [shape: bf16[8,72], index: 8, kind: input, shape index: {}]
  %s9 = inlined_call_operand.vmem [shape: f32[16,1], index: 9, kind: input, shape index: {}]
  %s10 = inlined_call_operand.vmem [shape: f32[16,1], index: 10, kind: input, shape index: {}]
  %s11 = inlined_call_operand.vmem [shape: bf16[8,16], index: 11, kind: input, shape index: {}]
  %s12 = inlined_call_operand.vmem [shape: f32[8,1], index: 12, kind: input, shape index: {}]
  %s13 = inlined_call_operand.vmem [shape: f32[8,1], index: 13, kind: input, shape index: {}]
  %s14 = inlined_call_operand.vmem [shape: bf16[8,72], index: 14, kind: input, shape index: {}]
  %s15 = inlined_call_operand.vmem [shape: f32[24,1], index: 15, kind: input, shape index: {}]
  %s16 = inlined_call_operand.vmem [shape: f32[24,1], index: 16, kind: input, shape index: {}]
  %s17 = inlined_call_operand.vmem [shape: bf16[8,24], index: 17, kind: input, shape index: {}]
  %s18 = inlined_call_operand.hbm [shape: f32[8,128], index: 18, kind: output, shape index: {}]
  %s19 = sld [smem:[#allocation0]]
  $region86: #{tpu_custom_call.1} parent=0
    _
  %s21 = ssub.s32 1, %s19
  %s22 = scalar_select 0, %s21, %s19
  $region1: #{tpu_custom_call.1} parent=0
    #allocation3 [shape = 'u8[262144]{0}', space=vmem, size = 0x40000, scoped, tag = 'input window, operand 2, single buffered']
    #allocation4 [shape = 's32[1]{0}', space=sflag, size = 0x4, scoped, tag = 'scoped memory for tpu_custom_call.1']
    #allocation5 [shape = 's32[1]{0}', space=sflag, size = 0x4, scoped, tag = 'scoped memory for tpu_custom_call.1']
    #allocation6 [shape = 'u8[4096]{0}', space=vmem, size = 0x1000, scoped, tag = 'output window, operand 0, single buffered']
    %23 = vsyncpa [#allocation4], 0
    %24 = vsyncpa [#allocation5], 0
    // Predicated region
    $region2: #{tpu_custom_call.1} parent=1 // pred_check
      _
    $region3: #{tpu_custom_call.1} parent=1 // pred_check_branch
      %26 = sbr.rel (0) target = $region5
    $region4: #{tpu_custom_call.1} parent=1 // pred_region
      _
    $region5: #{tpu_custom_call.1} parent=1 // pred_fallthru
      _
    // Predicated region
    $region6: #{tpu_custom_call.1} parent=1 // pred_check
      _
    $region7: #{tpu_custom_call.1} parent=1 // pred_check_branch
      %28 = sbr.rel (0) target = $region9
    $region8: #{tpu_custom_call.1} parent=1 // pred_region
      _
    $region9: #{tpu_custom_call.1} parent=1 // pred_fallthru
      _
    // Predicated region
    $region10: #{tpu_custom_call.1} parent=1 // pred_check
      _
    $region11: #{tpu_custom_call.1} parent=1 // pred_check_branch
      %30 = sbr.rel (0) target = $region13
    $region12: #{tpu_custom_call.1} parent=1 // pred_region
      %s32 = ssub.s32 8192, 8192
      %33 = vsyncadd [#allocation4], %s32
      %s34 = sshll.u32 [#allocation3], 4
      %s35 = int_to_ptr.vmem [resolvable:$true] %s34
      %40 = dma.hbm_to_vmem [thread:$0]  %s2, 8192, %s35, [#allocation4], 128, 128, 8
    $region13: #{tpu_custom_call.1} parent=1 // pred_fallthru
      _
    // Predicated region
    $region14: #{tpu_custom_call.1} parent=1 // pred_check
      _
    $region15: #{tpu_custom_call.1} parent=1 // pred_check_branch
      %42 = sbr.rel (0) target = $region17
    $region16: #{tpu_custom_call.1} parent=1 // pred_region
      _
    $region17: #{tpu_custom_call.1} parent=1 // pred_fallthru
      _
    // Predicated region
    $region18: #{tpu_custom_call.1} parent=1 // pred_check
      _
    $region19: #{tpu_custom_call.1} parent=1 // pred_check_branch
      %44 = sbr.rel (0) target = $region21
    $region20: #{tpu_custom_call.1} parent=1 // pred_region
      _
    $region21: #{tpu_custom_call.1} parent=1 // pred_fallthru
      _
    // Predicated region
    $region22: #{tpu_custom_call.1} parent=1 // pred_check
      _
    $region23: #{tpu_custom_call.1} parent=1 // pred_check_branch
      %46 = sbr.rel (0) target = $region25
    $region24: #{tpu_custom_call.1} parent=1 // pred_region
      _
    $region25: #{tpu_custom_call.1} parent=1 // pred_fallthru
      _
    // Predicated region
    $region26: #{tpu_custom_call.1} parent=1 // pred_check
      _
    $region27: #{tpu_custom_call.1} parent=1 // pred_check_branch
      %48 = sbr.rel (0) target = $region29
    $region28: #{tpu_custom_call.1} parent=1 // pred_region
      _
    $region29: #{tpu_custom_call.1} parent=1 // pred_fallthru
      _
    // Predicated region
    $region30: #{tpu_custom_call.1} parent=1 // pred_check
      _
    $region31: #{tpu_custom_call.1} parent=1 // pred_check_branch
      %50 = sbr.rel (0) target = $region33
    $region32: #{tpu_custom_call.1} parent=1 // pred_region
      _
    $region33: #{tpu_custom_call.1} parent=1 // pred_fallthru
      _
    // Predicated region
    $region34: #{tpu_custom_call.1} parent=1 // pred_check
      _
    $region35: #{tpu_custom_call.1} parent=1 // pred_check_branch
      %52 = sbr.rel (0) target = $region37
    $region36: #{tpu_custom_call.1} parent=1 // pred_region
      _
    $region37: #{tpu_custom_call.1} parent=1 // pred_fallthru
      _
    // Predicated region
    $region38: #{tpu_custom_call.1} parent=1 // pred_check
      _
    $region39: #{tpu_custom_call.1} parent=1 // pred_check_branch
      %54 = sbr.rel (0) target = $region41
    $region40: #{tpu_custom_call.1} parent=1 // pred_region
      _
    $region41: #{tpu_custom_call.1} parent=1 // pred_fallthru
      _
    // Predicated region
    $region42: #{tpu_custom_call.1} parent=1 // pred_check
      _
    $region43: #{tpu_custom_call.1} parent=1 // pred_check_branch
      %56 = sbr.rel (0) target = $region45
    $region44: #{tpu_custom_call.1} parent=1 // pred_region
      _
    $region45: #{tpu_custom_call.1} parent=1 // pred_fallthru
      _
    // Predicated region
    $region46: #{tpu_custom_call.1} parent=1 // pred_check
      _
    $region47: #{tpu_custom_call.1} parent=1 // pred_check_branch
      %58 = sbr.rel (0) target = $region49
    $region48: #{tpu_custom_call.1} parent=1 // pred_region
      _
    $region49: #{tpu_custom_call.1} parent=1 // pred_fallthru
      _
    // Predicated region
    $region50: #{tpu_custom_call.1} parent=1 // pred_check
      _
    $region51: #{tpu_custom_call.1} parent=1 // pred_check_branch
      %60 = sbr.rel (0) target = $region53
    $region52: #{tpu_custom_call.1} parent=1 // pred_region
      _
    $region53: #{tpu_custom_call.1} parent=1 // pred_fallthru
      _
    // Predicated region
    $region54: #{tpu_custom_call.1} parent=1 // pred_check
      _
    $region55: #{tpu_custom_call.1} parent=1 // pred_check_branch
      %62 = sbr.rel (0) target = $region57
    $region56: #{tpu_custom_call.1} parent=1 // pred_region
      _
    $region57: #{tpu_custom_call.1} parent=1 // pred_fallthru
      _
    // Predicated region
    $region58: #{tpu_custom_call.1} parent=1 // pred_check
      _
    $region59: #{tpu_custom_call.1} parent=1 // pred_check_branch
      %64 = sbr.rel (0) target = $region61
    $region60: #{tpu_custom_call.1} parent=1 // pred_region
      _
    $region61: #{tpu_custom_call.1} parent=1 // pred_fallthru
      _
    // Predicated region
    $region62: #{tpu_custom_call.1} parent=1 // pred_check
      _
    $region63: #{tpu_custom_call.1} parent=1 // pred_check_branch
      %66 = sbr.rel (0) target = $region65
    $region64: #{tpu_custom_call.1} parent=1 // pred_region
      _
    $region65: #{tpu_custom_call.1} parent=1 // pred_fallthru
      _
    // Predicated region
    $region66: #{tpu_custom_call.1} parent=1 // pred_check
      _
    $region67: #{tpu_custom_call.1} parent=1 // pred_check_branch
      %68 = sbr.rel (0) target = $region69
    $region68: #{tpu_custom_call.1} parent=1 // pred_region
      _
    $region69: #{tpu_custom_call.1} parent=1 // pred_fallthru
      _
    // Predicated region
    $region70: #{tpu_custom_call.1} parent=1 // pred_check
      _
    $region71: #{tpu_custom_call.1} parent=1 // pred_check_branch
      %70 = sbr.rel (0) target = $region73
    $region72: #{tpu_custom_call.1} parent=1 // pred_region
      _
    $region73: #{tpu_custom_call.1} parent=1 // pred_fallthru
      _
    // Predicated region
    $region74: #{tpu_custom_call.1} parent=1 // pred_check
      _
    $region75: #{tpu_custom_call.1} parent=1 // pred_check_branch
      %72 = sbr.rel (0) target = $region77
    $region76: #{tpu_custom_call.1} parent=1 // pred_region
      %73 = dma.done [#allocation4], 8192
    $region77: #{tpu_custom_call.1} parent=1 // pred_fallthru
      _
    %v75 = vld [vmem:[%s0] sm:$0xff]
    %v76 = vld [vmem:[%s0 + $0x8] sm:$0xff]
    %v77 = vld [vmem:[%s0 + $0x10] sm:$0xff]
    %v78 = vld [vmem:[%s0 + $0x18] sm:$0xff]
    %79 = vst [vmem:[#allocation2] sm:$0xff] %v75
    %80 = vst [vmem:[#allocation2 + $0x8] sm:$0xff] %v76
    %81 = vst [vmem:[#allocation2 + $0x10] sm:$0xff] %v77
    %82 = vst [vmem:[#allocation2 + $0x18] sm:$0xff] %v78
    %v83 = vld [vmem:[#allocation2] sm:$0xff]
    %v84 = vld [vmem:[#allocation2 + $0x8] sm:$0xff]
    %v85 = vld [vmem:[#allocation2 + $0x10] sm:$0xff]
    %v86 = vld [vmem:[#allocation2 + $0x18] sm:$0xff]
    %v87 = vld [vmem:[%s3] sm:$0xff]
    %89 = vset.pattern.permute.xlu0 0
    %90 = vperm.xlu0 %89, %v87
    %v91 = vpop.permute.xlu0 %90
    %v93 = vmul.f32 %v83, %v91
    %v94 = vmul.f32 %v84, %v91
    %v95 = vmul.f32 %v85, %v91
    %v96 = vmul.f32 %v86, %v91
    %v97 = vld [vmem:[%s4] sm:$0xff]
    %99 = vset.pattern.permute.xlu0 0
    %100 = vperm.xlu0 %99, %v97
    %v101 = vpop.permute.xlu0 %100
    %v103 = vadd.f32 %v93, %v101
    %v104 = vadd.f32 %v94, %v101
    %v105 = vadd.f32 %v95, %v101
    %v106 = vadd.f32 %v96, %v101
    %v107 = vmax.f32 %v103, 0.0
    %v108 = vmax.f32 %v104, 0.0
    %v109 = vmax.f32 %v105, 0.0
    %v110 = vmax.f32 %v106, 0.0
    %v111 = vld [vmem:[%s5] sm:$0xf]
    %v112 = vpack.c.bf16 %v107, %v107
    %v113 = vpack.c.bf16 %v108, %v108
    %v114 = vpack.c.bf16 %v109, %v109
    %v115 = vpack.c.bf16 %v110, %v110
    %vm116 = vcmask 64512
    %v118 = vsel %vm116, %v111, 0
    %vm120 = vcmask 1043456
    %v122 = vsel %vm120, %v112, 0
    %v125 = vsel %vm120, %v113, 0
    %v128 = vsel %vm120, %v114, 0
    %v131 = vsel %vm120, %v115, 0
    %133 = vmatprep.subr.bf16.mxu0 %v125
    %134 = vmatpush1.bf16.msra.mxu0 %v122
    %135 = vmatprep.subr.bf16.mxu0 0
    %136 = vmatpush1.bf16.msra.mxu0 0
    %137 = vmatprep.subr.bf16.mxu0 0
    %138 = vmatpush1.bf16.msra.mxu0 0
    %139 = vmatprep.subr.bf16.mxu0 0
    %140 = vmatpush1.bf16.msra.mxu0 0
    %141 = vmatprep.subr.bf16.mxu0 0
    %142 = vmatpush1.bf16.msra.mxu0 0
    %143 = vmatprep.subr.bf16.mxu0 0
    %144 = vmatpush1.bf16.msra.mxu0 0
    %145 = vmatprep.subr.bf16.mxu0 0
    %146 = vmatpush1.bf16.msra.mxu0 0
    %147 = vmatprep.subr.bf16.mxu0 0
    %148 = vmatpush1.bf16.msra.mxu0 0
    %149 = vmatprep.subr.bf16.mxu0 0
    %150 = vmatpush1.bf16.msra.mxu0 0
    %151 = vmatprep.subr.bf16.mxu0 0
    %152 = vmatpush1.bf16.msra.mxu0 0
    %153 = vmatprep.subr.bf16.mxu0 0
    %154 = vmatpush1.bf16.msra.mxu0 0
    %155 = vmatprep.subr.bf16.mxu0 0
    %156 = vmatpush1.bf16.msra.mxu0 0
    %157 = vmatprep.subr.bf16.mxu0 0
    %158 = vmatpush1.bf16.msra.mxu0 0
    %159 = vmatprep.subr.bf16.mxu0 0
    %160 = vmatpush1.bf16.msra.mxu0 0
    %161 = vmatprep.subr.bf16.mxu0 0
    %162 = vmatpush1.bf16.msra.mxu0 0
    %163 = vmatprep.subr.bf16.mxu0 0
    %164 = vmatpush1.bf16.msra.mxu0 0
    %165 = vmatprep.mubr.bf16.mxu0 0
    %166 = vmatmul.mubr.bf16.gmra.mrb[0].mxu0 %v118
    %v167 = vpop.f32.mrb[0].mxu0
    %v168 = vadd.f32 0.0, %v167
    %v169 = vpop.f32.mrb[0].mxu0
    %v170 = vadd.f32 0.0, %v169
    %v171 = vpop.f32.mrb[0].mxu0
    %v172 = vpop.f32.mrb[0].mxu0
    %173 = vdwg.mxu0
    %174 = vmatprep.subr.bf16.mxu0 %v131
    %175 = vmatpush1.bf16.msra.mxu0 %v128
    %176 = vmatprep.subr.bf16.mxu0 0
    %177 = vmatpush1.bf16.msra.mxu0 0
    %178 = vmatprep.subr.bf16.mxu0 0
    %179 = vmatpush1.bf16.msra.mxu0 0
    %180 = vmatprep.subr.bf16.mxu0 0
    %181 = vmatpush1.bf16.msra.mxu0 0
    %182 = vmatprep.subr.bf16.mxu0 0
    %183 = vmatpush1.bf16.msra.mxu0 0
    %184 = vmatprep.subr.bf16.mxu0 0
    %185 = vmatpush1.bf16.msra.mxu0 0
    %186 = vmatprep.subr.bf16.mxu0 0
    %187 = vmatpush1.bf16.msra.mxu0 0
    %188 = vmatprep.subr.bf16.mxu0 0
    %189 = vmatpush1.bf16.msra.mxu0 0
    %190 = vmatprep.subr.bf16.mxu0 0
    %191 = vmatpush1.bf16.msra.mxu0 0
    %192 = vmatprep.subr.bf16.mxu0 0
    %193 = vmatpush1.bf16.msra.mxu0 0
    %194 = vmatprep.subr.bf16.mxu0 0
    %195 = vmatpush1.bf16.msra.mxu0 0
    %196 = vmatprep.subr.bf16.mxu0 0
    %197 = vmatpush1.bf16.msra.mxu0 0
    %198 = vmatprep.subr.bf16.mxu0 0
    %199 = vmatpush1.bf16.msra.mxu0 0
    %200 = vmatprep.subr.bf16.mxu0 0
    %201 = vmatpush1.bf16.msra.mxu0 0
    %202 = vmatprep.subr.bf16.mxu0 0
    %203 = vmatpush1.bf16.msra.mxu0 0
    %204 = vmatprep.subr.bf16.mxu0 0
    %205 = vmatpush1.bf16.msra.mxu0 0
    %206 = vmatprep.mubr.bf16.mxu0 0
    %207 = vmatmul.mubr.bf16.gmra.mrb[0].mxu0 %v118
    %v208 = vpop.f32.mrb[0].mxu0
    %v209 = vadd.f32 0.0, %v208
    %v210 = vpop.f32.mrb[0].mxu0
    %v211 = vadd.f32 0.0, %v210
    %v212 = vpop.f32.mrb[0].mxu0
    %v213 = vpop.f32.mrb[0].mxu0
    %214 = vdwg.mxu0
    %v215 = vld [vmem:[%s6] sm:$0xff]
    %217 = vset.pattern.permute.xlu0 0
    %218 = vperm.xlu0 %217, %v215
    %v219 = vpop.permute.xlu0 %218
    %v221 = vmul.f32 %v168, %v219
    %v222 = vmul.f32 %v170, %v219
    %v223 = vmul.f32 %v209, %v219
    %v224 = vmul.f32 %v211, %v219
    %v225 = vld [vmem:[%s7] sm:$0xff]
    %227 = vset.pattern.permute.xlu0 0
    %228 = vperm.xlu0 %227, %v225
    %v229 = vpop.permute.xlu0 %228
    %v231 = vadd.f32 %v221, %v229
    %v232 = vadd.f32 %v222, %v229
    %v233 = vadd.f32 %v223, %v229
    %v234 = vadd.f32 %v224, %v229
    %v235 = vmax.f32 %v231, 0.0
    %v236 = vmax.f32 %v232, 0.0
    %v237 = vmax.f32 %v233, 0.0
    %v238 = vmax.f32 %v234, 0.0
    %239 = vrot.lane.b32.xlu0 %v235, 17
    %v240 = vpop.permute.xlu0 %239
    %241 = vrot.lane.b32.xlu0 %v236, 17
    %v242 = vpop.permute.xlu0 %241
    %243 = vrot.lane.b32.xlu0 %v237, 17
    %v244 = vpop.permute.xlu0 %243
    %245 = vrot.lane.b32.xlu0 %v238, 17
    %v246 = vpop.permute.xlu0 %245
    %v247 = vlaneseq
    %v248 = vand.u32 %v247, 127
    %vm249 = vcmp.lt.s32.totalorder %v248, 17
    %v250 = vsel %vm249, %v244, %v246
    %v251 = vsel %vm249, %v242, %v244
    %v252 = vsel %vm249, %v240, %v242
    %v253 = vsel %vm249, %v246, %v240
    %v254 = vld [vmem:[%s1] ss:$8 sm:$0xf]
    %v256 = vlaneseq
    %v257 = vshrl.u32 %v256, 7
    %v258 = vsub.s32 0, %v257
    %v259 = vrot.slane %v254, %v258
    %v260 = vlaneseq
    %v261 = vshrl.u32 %v260, 7
    %v262 = vsub.s32 1, %v261
    %v263 = vrot.slane %v254, %v262
    %v264 = vlaneseq
    %v265 = vshrl.u32 %v264, 7
    %v266 = vsub.s32 2, %v265
    %v267 = vrot.slane %v254, %v266
    %v268 = vlaneseq
    %v269 = vshrl.u32 %v268, 7
    %v270 = vsub.s32 3, %v269
    %v271 = vrot.slane %v254, %v270
    %v276 = vmul.f32 %v253, %v259
    %v277 = vmul.f32 %v252, %v263
    %v278 = vmul.f32 %v251, %v267
    %v279 = vmul.f32 %v250, %v271
    %280 = vrot.lane.b32.xlu0 %v235, 16
    %v281 = vpop.permute.xlu0 %280
    %282 = vrot.lane.b32.xlu0 %v236, 16
    %v283 = vpop.permute.xlu0 %282
    %284 = vrot.lane.b32.xlu0 %v237, 16
    %v285 = vpop.permute.xlu0 %284
    %286 = vrot.lane.b32.xlu0 %v238, 16
    %v287 = vpop.permute.xlu0 %286
    %vm288 = vcmp.lt.s32.totalorder %v248, 16
    %v289 = vsel %vm288, %v285, %v287
    %v290 = vsel %vm288, %v283, %v285
    %v291 = vsel %vm288, %v281, %v283
    %v292 = vsel %vm288, %v287, %v281
    %s293 = scalar_lea.vmem %s1, 1
    %v294 = vld [vmem:[%s293] ss:$8 sm:$0xf]
    %v296 = vlaneseq
    %v297 = vshrl.u32 %v296, 7
    %v298 = vsub.s32 0, %v297
    %v299 = vrot.slane %v294, %v298
    %v300 = vlaneseq
    %v301 = vshrl.u32 %v300, 7
    %v302 = vsub.s32 1, %v301
    %v303 = vrot.slane %v294, %v302
    %v304 = vlaneseq
    %v305 = vshrl.u32 %v304, 7
    %v306 = vsub.s32 2, %v305
    %v307 = vrot.slane %v294, %v306
    %v308 = vlaneseq
    %v309 = vshrl.u32 %v308, 7
    %v310 = vsub.s32 3, %v309
    %v311 = vrot.slane %v294, %v310
    %v316 = vmul.f32 %v292, %v299
    %v317 = vmul.f32 %v291, %v303
    %v318 = vmul.f32 %v290, %v307
    %v319 = vmul.f32 %v289, %v311
    %320 = vrot.lane.b32.xlu0 %v235, 15
    %v321 = vpop.permute.xlu0 %320
    %322 = vrot.lane.b32.xlu0 %v236, 15
    %v323 = vpop.permute.xlu0 %322
    %324 = vrot.lane.b32.xlu0 %v237, 15
    %v325 = vpop.permute.xlu0 %324
    %326 = vrot.lane.b32.xlu0 %v238, 15
    %v327 = vpop.permute.xlu0 %326
    %vm328 = vcmp.lt.s32.totalorder %v248, 15
    %v329 = vsel %vm328, %v325, %v327
    %v330 = vsel %vm328, %v323, %v325
    %v331 = vsel %vm328, %v321, %v323
    %v332 = vsel %vm328, %v327, %v321
    %s333 = scalar_lea.vmem %s1, 2
    %v334 = vld [vmem:[%s333] ss:$8 sm:$0xf]
    %v336 = vlaneseq
    %v337 = vshrl.u32 %v336, 7
    %v338 = vsub.s32 0, %v337
    %v339 = vrot.slane %v334, %v338
    %v340 = vlaneseq
    %v341 = vshrl.u32 %v340, 7
    %v342 = vsub.s32 1, %v341
    %v343 = vrot.slane %v334, %v342
    %v344 = vlaneseq
    %v345 = vshrl.u32 %v344, 7
    %v346 = vsub.s32 2, %v345
    %v347 = vrot.slane %v334, %v346
    %v348 = vlaneseq
    %v349 = vshrl.u32 %v348, 7
    %v350 = vsub.s32 3, %v349
    %v351 = vrot.slane %v334, %v350
    %v356 = vmul.f32 %v332, %v339
    %v357 = vmul.f32 %v331, %v343
    %v358 = vmul.f32 %v330, %v347
    %v359 = vmul.f32 %v329, %v351
    %360 = vrot.lane.b32.xlu0 %v235, 1
    %v361 = vpop.permute.xlu0 %360
    %362 = vrot.lane.b32.xlu0 %v236, 1
    %v363 = vpop.permute.xlu0 %362
    %364 = vrot.lane.b32.xlu0 %v237, 1
    %v365 = vpop.permute.xlu0 %364
    %366 = vrot.lane.b32.xlu0 %v238, 1
    %v367 = vpop.permute.xlu0 %366
    %vm368 = vcmp.lt.s32.totalorder %v248, 1
    %v369 = vsel %vm368, %v365, %v367
    %v370 = vsel %vm368, %v363, %v365
    %v371 = vsel %vm368, %v361, %v363
    %v372 = vsel %vm368, %v367, %v361
    %s373 = scalar_lea.vmem %s1, 3
    %v374 = vld [vmem:[%s373] ss:$8 sm:$0xf]
    %v376 = vlaneseq
    %v377 = vshrl.u32 %v376, 7
    %v378 = vsub.s32 0, %v377
    %v379 = vrot.slane %v374, %v378
    %v380 = vlaneseq
    %v381 = vshrl.u32 %v380, 7
    %v382 = vsub.s32 1, %v381
    %v383 = vrot.slane %v374, %v382
    %v384 = vlaneseq
    %v385 = vshrl.u32 %v384, 7
    %v386 = vsub.s32 2, %v385
    %v387 = vrot.slane %v374, %v386
    %v388 = vlaneseq
    %v389 = vshrl.u32 %v388, 7
    %v390 = vsub.s32 3, %v389
    %v391 = vrot.slane %v374, %v390
    %v396 = vmul.f32 %v372, %v379
    %v397 = vmul.f32 %v371, %v383
    %v398 = vmul.f32 %v370, %v387
    %v399 = vmul.f32 %v369, %v391
    %400 = vrot.lane.b32.xlu0 %v235, 127
    %v401 = vpop.permute.xlu0 %400
    %402 = vrot.lane.b32.xlu0 %v236, 127
    %v403 = vpop.permute.xlu0 %402
    %404 = vrot.lane.b32.xlu0 %v237, 127
    %v405 = vpop.permute.xlu0 %404
    %406 = vrot.lane.b32.xlu0 %v238, 127
    %v407 = vpop.permute.xlu0 %406
    %vm408 = vcmp.lt.s32.totalorder %v248, 127
    %v409 = vsel %vm408, %v405, %v407
    %v410 = vsel %vm408, %v403, %v405
    %v411 = vsel %vm408, %v401, %v403
    %v412 = vsel %vm408, %v407, %v401
    %s413 = scalar_lea.vmem %s1, 5
    %v414 = vld [vmem:[%s413] ss:$8 sm:$0xf]
    %v416 = vlaneseq
    %v417 = vshrl.u32 %v416, 7
    %v418 = vsub.s32 0, %v417
    %v419 = vrot.slane %v414, %v418
    %v420 = vlaneseq
    %v421 = vshrl.u32 %v420, 7
    %v422 = vsub.s32 1, %v421
    %v423 = vrot.slane %v414, %v422
    %v424 = vlaneseq
    %v425 = vshrl.u32 %v424, 7
    %v426 = vsub.s32 2, %v425
    %v427 = vrot.slane %v414, %v426
    %v428 = vlaneseq
    %v429 = vshrl.u32 %v428, 7
    %v430 = vsub.s32 3, %v429
    %v431 = vrot.slane %v414, %v430
    %v436 = vmul.f32 %v411, %v419
    %v437 = vmul.f32 %v410, %v423
    %v438 = vmul.f32 %v409, %v427
    %v439 = vmul.f32 %v412, %v431
    %440 = vrot.lane.b32.xlu0 %v235, 113
    %v441 = vpop.permute.xlu0 %440
    %442 = vrot.lane.b32.xlu0 %v236, 113
    %v443 = vpop.permute.xlu0 %442
    %444 = vrot.lane.b32.xlu0 %v237, 113
    %v445 = vpop.permute.xlu0 %444
    %446 = vrot.lane.b32.xlu0 %v238, 113
    %v447 = vpop.permute.xlu0 %446
    %vm448 = vcmp.lt.s32.totalorder %v248, 113
    %v449 = vsel %vm448, %v445, %v447
    %v450 = vsel %vm448, %v443, %v445
    %v451 = vsel %vm448, %v441, %v443
    %v452 = vsel %vm448, %v447, %v441
    %s453 = scalar_lea.vmem %s1, 6
    %v454 = vld [vmem:[%s453] ss:$8 sm:$0xf]
    %v456 = vlaneseq
    %v457 = vshrl.u32 %v456, 7
    %v458 = vsub.s32 0, %v457
    %v459 = vrot.slane %v454, %v458
    %v460 = vlaneseq
    %v461 = vshrl.u32 %v460, 7
    %v462 = vsub.s32 1, %v461
    %v463 = vrot.slane %v454, %v462
    %v464 = vlaneseq
    %v465 = vshrl.u32 %v464, 7
    %v466 = vsub.s32 2, %v465
    %v467 = vrot.slane %v454, %v466
    %v468 = vlaneseq
    %v469 = vshrl.u32 %v468, 7
    %v470 = vsub.s32 3, %v469
    %v471 = vrot.slane %v454, %v470
    %v476 = vmul.f32 %v451, %v459
    %v477 = vmul.f32 %v450, %v463
    %v478 = vmul.f32 %v449, %v467
    %v479 = vmul.f32 %v452, %v471
    %480 = vrot.lane.b32.xlu0 %v235, 112
    %v481 = vpop.permute.xlu0 %480
    %482 = vrot.lane.b32.xlu0 %v236, 112
    %v483 = vpop.permute.xlu0 %482
    %484 = vrot.lane.b32.xlu0 %v237, 112
    %v485 = vpop.permute.xlu0 %484
    %486 = vrot.lane.b32.xlu0 %v238, 112
    %v487 = vpop.permute.xlu0 %486
    %vm488 = vcmp.lt.s32.totalorder %v248, 112
    %v489 = vsel %vm488, %v485, %v487
    %v490 = vsel %vm488, %v483, %v485
    %v491 = vsel %vm488, %v481, %v483
    %v492 = vsel %vm488, %v487, %v481
    %s493 = scalar_lea.vmem %s1, 7
    %v494 = vld [vmem:[%s493] ss:$8 sm:$0xf]
    %v496 = vlaneseq
    %v497 = vshrl.u32 %v496, 7
    %v498 = vsub.s32 0, %v497
    %v499 = vrot.slane %v494, %v498
    %v500 = vlaneseq
    %v501 = vshrl.u32 %v500, 7
    %v502 = vsub.s32 1, %v501
    %v503 = vrot.slane %v494, %v502
    %v504 = vlaneseq
    %v505 = vshrl.u32 %v504, 7
    %v506 = vsub.s32 2, %v505
    %v507 = vrot.slane %v494, %v506
    %v508 = vlaneseq
    %v509 = vshrl.u32 %v508, 7
    %v510 = vsub.s32 3, %v509
    %v511 = vrot.slane %v494, %v510
    %v516 = vmul.f32 %v491, %v499
    %v517 = vmul.f32 %v490, %v503
    %v518 = vmul.f32 %v489, %v507
    %v519 = vmul.f32 %v492, %v511
    %520 = vrot.lane.b32.xlu0 %v235, 111
    %v521 = vpop.permute.xlu0 %520
    %522 = vrot.lane.b32.xlu0 %v236, 111
    %v523 = vpop.permute.xlu0 %522
    %524 = vrot.lane.b32.xlu0 %v237, 111
    %v525 = vpop.permute.xlu0 %524
    %526 = vrot.lane.b32.xlu0 %v238, 111
    %v527 = vpop.permute.xlu0 %526
    %vm528 = vcmp.lt.s32.totalorder %v248, 111
    %v529 = vsel %vm528, %v525, %v527
    %v530 = vsel %vm528, %v523, %v525
    %v531 = vsel %vm528, %v521, %v523
    %v532 = vsel %vm528, %v527, %v521
    %s533 = scalar_lea.vmem %s1, 32
    %v534 = vld [vmem:[%s533] ss:$8 sm:$0xf]
    %v536 = vlaneseq
    %v537 = vshrl.u32 %v536, 7
    %v538 = vsub.s32 0, %v537
    %v539 = vrot.slane %v534, %v538
    %v540 = vlaneseq
    %v541 = vshrl.u32 %v540, 7
    %v542 = vsub.s32 1, %v541
    %v543 = vrot.slane %v534, %v542
    %v544 = vlaneseq
    %v545 = vshrl.u32 %v544, 7
    %v546 = vsub.s32 2, %v545
    %v547 = vrot.slane %v534, %v546
    %v548 = vlaneseq
    %v549 = vshrl.u32 %v548, 7
    %v550 = vsub.s32 3, %v549
    %v551 = vrot.slane %v534, %v550
    %v556 = vmul.f32 %v531, %v539
    %v557 = vmul.f32 %v530, %v543
    %v558 = vmul.f32 %v529, %v547
    %v559 = vmul.f32 %v532, %v551
    %v560 = vld [vmem:[%s8] sm:$0xf]
    %v561 = vpack.c.bf16 %v316, %v276
    %v562 = vpack.c.bf16 %v317, %v277
    %v563 = vpack.c.bf16 %v318, %v278
    %v564 = vpack.c.bf16 %v319, %v279
    %v565 = vpack.c.bf16 %v396, %v356
    %v566 = vpack.c.bf16 %v397, %v357
    %v567 = vpack.c.bf16 %v398, %v358
    %v568 = vpack.c.bf16 %v399, %v359
    %v569 = vpack.c.bf16 %v436, %v235
    %v570 = vpack.c.bf16 %v437, %v236
    %v571 = vpack.c.bf16 %v438, %v237
    %v572 = vpack.c.bf16 %v439, %v238
    %v573 = vpack.c.bf16 %v516, %v476
    %v574 = vpack.c.bf16 %v517, %v477
    %v575 = vpack.c.bf16 %v518, %v478
    %v576 = vpack.c.bf16 %v519, %v479
    %v577 = vpack.c.bf16 %v556, %v556
    %v578 = vpack.c.bf16 %v557, %v557
    %v579 = vpack.c.bf16 %v558, %v558
    %v580 = vpack.c.bf16 %v559, %v559
    %vm581 = vcmask 588800
    %v583 = vsel %vm581, %v560, 0
    %v586 = vsel %vm120, %v577, 0
    %v589 = vsel %vm120, %v578, 0
    %v592 = vsel %vm120, %v579, 0
    %v595 = vsel %vm120, %v580, 0
    %597 = vmatprep.subr.bf16.mxu0 %v562
    %598 = vmatpush1.bf16.msra.mxu0 %v561
    %599 = vmatprep.subr.bf16.mxu0 %v566
    %600 = vmatpush1.bf16.msra.mxu0 %v565
    %601 = vmatprep.subr.bf16.mxu0 %v570
    %602 = vmatpush1.bf16.msra.mxu0 %v569
    %603 = vmatprep.subr.bf16.mxu0 %v574
    %604 = vmatpush1.bf16.msra.mxu0 %v573
    %605 = vmatprep.subr.bf16.mxu0 %v589
    %606 = vmatpush1.bf16.msra.mxu0 %v586
    %607 = vmatprep.subr.bf16.mxu0 0
    %608 = vmatpush1.bf16.msra.mxu0 0
    %609 = vmatprep.subr.bf16.mxu0 0
    %610 = vmatpush1.bf16.msra.mxu0 0
    %611 = vmatprep.subr.bf16.mxu0 0
    %612 = vmatpush1.bf16.msra.mxu0 0
    %613 = vmatprep.subr.bf16.mxu0 0
    %614 = vmatpush1.bf16.msra.mxu0 0
    %615 = vmatprep.subr.bf16.mxu0 0
    %616 = vmatpush1.bf16.msra.mxu0 0
    %617 = vmatprep.subr.bf16.mxu0 0
    %618 = vmatpush1.bf16.msra.mxu0 0
    %619 = vmatprep.subr.bf16.mxu0 0
    %620 = vmatpush1.bf16.msra.mxu0 0
    %621 = vmatprep.subr.bf16.mxu0 0
    %622 = vmatpush1.bf16.msra.mxu0 0
    %623 = vmatprep.subr.bf16.mxu0 0
    %624 = vmatpush1.bf16.msra.mxu0 0
    %625 = vmatprep.subr.bf16.mxu0 0
    %626 = vmatpush1.bf16.msra.mxu0 0
    %627 = vmatprep.subr.bf16.mxu0 0
    %628 = vmatpush1.bf16.msra.mxu0 0
    %629 = vmatprep.mubr.bf16.mxu0 0
    %630 = vmatmul.mubr.bf16.gmra.mrb[0].mxu0 %v583
    %v631 = vpop.f32.mrb[0].mxu0
    %v632 = vadd.f32 0.0, %v631
    %v633 = vpop.f32.mrb[0].mxu0
    %v634 = vadd.f32 0.0, %v633
    %v635 = vpop.f32.mrb[0].mxu0
    %v636 = vpop.f32.mrb[0].mxu0
    %637 = vdwg.mxu0
    %638 = vmatprep.subr.bf16.mxu0 %v564
    %639 = vmatpush1.bf16.msra.mxu0 %v563
    %640 = vmatprep.subr.bf16.mxu0 %v568
    %641 = vmatpush1.bf16.msra.mxu0 %v567
    %642 = vmatprep.subr.bf16.mxu0 %v572
    %643 = vmatpush1.bf16.msra.mxu0 %v571
    %644 = vmatprep.subr.bf16.mxu0 %v576
    %645 = vmatpush1.bf16.msra.mxu0 %v575
    %646 = vmatprep.subr.bf16.mxu0 %v595
    %647 = vmatpush1.bf16.msra.mxu0 %v592
    %648 = vmatprep.subr.bf16.mxu0 0
    %649 = vmatpush1.bf16.msra.mxu0 0
    %650 = vmatprep.subr.bf16.mxu0 0
    %651 = vmatpush1.bf16.msra.mxu0 0
    %652 = vmatprep.subr.bf16.mxu0 0
    %653 = vmatpush1.bf16.msra.mxu0 0
    %654 = vmatprep.subr.bf16.mxu0 0
    %655 = vmatpush1.bf16.msra.mxu0 0
    %656 = vmatprep.subr.bf16.mxu0 0
    %657 = vmatpush1.bf16.msra.mxu0 0
    %658 = vmatprep.subr.bf16.mxu0 0
    %659 = vmatpush1.bf16.msra.mxu0 0
    %660 = vmatprep.subr.bf16.mxu0 0
    %661 = vmatpush1.bf16.msra.mxu0 0
    %662 = vmatprep.subr.bf16.mxu0 0
    %663 = vmatpush1.bf16.msra.mxu0 0
    %664 = vmatprep.subr.bf16.mxu0 0
    %665 = vmatpush1.bf16.msra.mxu0 0
    %666 = vmatprep.subr.bf16.mxu0 0
    %667 = vmatpush1.bf16.msra.mxu0 0
    %668 = vmatprep.subr.bf16.mxu0 0
    %669 = vmatpush1.bf16.msra.mxu0 0
    %670 = vmatprep.mubr.bf16.mxu0 0
    %671 = vmatmul.mubr.bf16.gmra.mrb[0].mxu0 %v583
    %v672 = vpop.f32.mrb[0].mxu0
    %v673 = vadd.f32 0.0, %v672
    %v674 = vpop.f32.mrb[0].mxu0
    %v675 = vadd.f32 0.0, %v674
    %v676 = vpop.f32.mrb[0].mxu0
    %v677 = vpop.f32.mrb[0].mxu0
    %678 = vdwg.mxu0
    %679 = vst [vmem:[#allocation2 + $0x20] sm:$0xff] %v632
    %680 = vst [vmem:[#allocation2 + $0x28] sm:$0xff] %v634
    %681 = vst [vmem:[#allocation2 + $0x30] sm:$0xff] %v673
    %682 = vst [vmem:[#allocation2 + $0x38] sm:$0xff] %v675
    %v683 = vld [vmem:[#allocation2] sm:$0xff]
    %v684 = vld [vmem:[#allocation2 + $0x8] sm:$0xff]
    %v685 = vld [vmem:[#allocation2 + $0x10] sm:$0xff]
    %v686 = vld [vmem:[#allocation2 + $0x18] sm:$0xff]
    %v687 = vld [vmem:[#allocation2 + $0x20] sm:$0xff]
    %v688 = vld [vmem:[#allocation2 + $0x28] sm:$0xff]
    %v689 = vld [vmem:[#allocation2 + $0x30] sm:$0xff]
    %v690 = vld [vmem:[#allocation2 + $0x38] sm:$0xff]
    %v691 = vld [vmem:[%s9] sm:$0xff]
    %v692 = vld [vmem:[%s9 + $0x8] sm:$0xff]
    %694 = vset.pattern.permute.xlu0 0
    %695 = vperm.xlu0 %694, %v691
    %v696 = vpop.permute.xlu0 %695
    %699 = vset.pattern.permute.xlu0 0
    %700 = vperm.xlu0 %699, %v692
    %v701 = vpop.permute.xlu0 %700
    %v703 = vmul.f32 %v683, %v696
    %v704 = vmul.f32 %v684, %v696
    %v705 = vmul.f32 %v685, %v696
    %v706 = vmul.f32 %v686, %v696
    %v707 = vmul.f32 %v687, %v701
    %v708 = vmul.f32 %v688, %v701
    %v709 = vmul.f32 %v689, %v701
    %v710 = vmul.f32 %v690, %v701
    %v711 = vld [vmem:[%s10] sm:$0xff]
    %v712 = vld [vmem:[%s10 + $0x8] sm:$0xff]
    %714 = vset.pattern.permute.xlu0 0
    %715 = vperm.xlu0 %714, %v711
    %v716 = vpop.permute.xlu0 %715
    %719 = vset.pattern.permute.xlu0 0
    %720 = vperm.xlu0 %719, %v712
    %v721 = vpop.permute.xlu0 %720
    %v723 = vadd.f32 %v703, %v716
    %v724 = vadd.f32 %v704, %v716
    %v725 = vadd.f32 %v705, %v716
    %v726 = vadd.f32 %v706, %v716
    %v727 = vadd.f32 %v707, %v721
    %v728 = vadd.f32 %v708, %v721
    %v729 = vadd.f32 %v709, %v721
    %v730 = vadd.f32 %v710, %v721
    %v731 = vmax.f32 %v723, 0.0
    %v732 = vmax.f32 %v724, 0.0
    %v733 = vmax.f32 %v725, 0.0
    %v734 = vmax.f32 %v726, 0.0
    %v735 = vmax.f32 %v727, 0.0
    %v736 = vmax.f32 %v728, 0.0
    %v737 = vmax.f32 %v729, 0.0
    %v738 = vmax.f32 %v730, 0.0
    %v739 = vld [vmem:[%s11] sm:$0xf]
    %v740 = vpack.c.bf16 %v735, %v731
    %v741 = vpack.c.bf16 %v736, %v732
    %v742 = vpack.c.bf16 %v737, %v733
    %v743 = vpack.c.bf16 %v738, %v734
    %vm744 = vcmask 130048
    %v746 = vsel %vm744, %v739, 0
    %748 = vmatprep.subr.bf16.mxu0 %v741
    %749 = vmatpush1.bf16.msra.mxu0 %v740
    %750 = vmatprep.subr.bf16.mxu0 0
    %751 = vmatpush1.bf16.msra.mxu0 0
    %752 = vmatprep.subr.bf16.mxu0 0
    %753 = vmatpush1.bf16.msra.mxu0 0
    %754 = vmatprep.subr.bf16.mxu0 0
    %755 = vmatpush1.bf16.msra.mxu0 0
    %756 = vmatprep.subr.bf16.mxu0 0
    %757 = vmatpush1.bf16.msra.mxu0 0
    %758 = vmatprep.subr.bf16.mxu0 0
    %759 = vmatpush1.bf16.msra.mxu0 0
    %760 = vmatprep.subr.bf16.mxu0 0
    %761 = vmatpush1.bf16.msra.mxu0 0
    %762 = vmatprep.subr.bf16.mxu0 0
    %763 = vmatpush1.bf16.msra.mxu0 0
    %764 = vmatprep.subr.bf16.mxu0 0
    %765 = vmatpush1.bf16.msra.mxu0 0
    %766 = vmatprep.subr.bf16.mxu0 0
    %767 = vmatpush1.bf16.msra.mxu0 0
    %768 = vmatprep.subr.bf16.mxu0 0
    %769 = vmatpush1.bf16.msra.mxu0 0
    %770 = vmatprep.subr.bf16.mxu0 0
    %771 = vmatpush1.bf16.msra.mxu0 0
    %772 = vmatprep.subr.bf16.mxu0 0
    %773 = vmatpush1.bf16.msra.mxu0 0
    %774 = vmatprep.subr.bf16.mxu0 0
    %775 = vmatpush1.bf16.msra.mxu0 0
    %776 = vmatprep.subr.bf16.mxu0 0
    %777 = vmatpush1.bf16.msra.mxu0 0
    %778 = vmatprep.subr.bf16.mxu0 0
    %779 = vmatpush1.bf16.msra.mxu0 0
    %780 = vmatprep.mubr.bf16.mxu0 0
    %781 = vmatmul.mubr.bf16.gmra.mrb[0].mxu0 %v746
    %v782 = vpop.f32.mrb[0].mxu0
    %v783 = vadd.f32 0.0, %v782
    %v784 = vpop.f32.mrb[0].mxu0
    %v785 = vadd.f32 0.0, %v784
    %v786 = vpop.f32.mrb[0].mxu0
    %v787 = vpop.f32.mrb[0].mxu0
    %788 = vdwg.mxu0
    %789 = vmatprep.subr.bf16.mxu0 %v743
    %790 = vmatpush1.bf16.msra.mxu0 %v742
    %791 = vmatprep.subr.bf16.mxu0 0
    %792 = vmatpush1.bf16.msra.mxu0 0
    %793 = vmatprep.subr.bf16.mxu0 0
    %794 = vmatpush1.bf16.msra.mxu0 0
    %795 = vmatprep.subr.bf16.mxu0 0
    %796 = vmatpush1.bf16.msra.mxu0 0
    %797 = vmatprep.subr.bf16.mxu0 0
    %798 = vmatpush1.bf16.msra.mxu0 0
    %799 = vmatprep.subr.bf16.mxu0 0
    %800 = vmatpush1.bf16.msra.mxu0 0
    %801 = vmatprep.subr.bf16.mxu0 0
    %802 = vmatpush1.bf16.msra.mxu0 0
    %803 = vmatprep.subr.bf16.mxu0 0
    %804 = vmatpush1.bf16.msra.mxu0 0
    %805 = vmatprep.subr.bf16.mxu0 0
    %806 = vmatpush1.bf16.msra.mxu0 0
    %807 = vmatprep.subr.bf16.mxu0 0
    %808 = vmatpush1.bf16.msra.mxu0 0
    %809 = vmatprep.subr.bf16.mxu0 0
    %810 = vmatpush1.bf16.msra.mxu0 0
    %811 = vmatprep.subr.bf16.mxu0 0
    %812 = vmatpush1.bf16.msra.mxu0 0
    %813 = vmatprep.subr.bf16.mxu0 0
    %814 = vmatpush1.bf16.msra.mxu0 0
    %815 = vmatprep.subr.bf16.mxu0 0
    %816 = vmatpush1.bf16.msra.mxu0 0
    %817 = vmatprep.subr.bf16.mxu0 0
    %818 = vmatpush1.bf16.msra.mxu0 0
    %819 = vmatprep.subr.bf16.mxu0 0
    %820 = vmatpush1.bf16.msra.mxu0 0
    %821 = vmatprep.mubr.bf16.mxu0 0
    %822 = vmatmul.mubr.bf16.gmra.mrb[0].mxu0 %v746
    %v823 = vpop.f32.mrb[0].mxu0
    %v824 = vadd.f32 0.0, %v823
    %v825 = vpop.f32.mrb[0].mxu0
    %v826 = vadd.f32 0.0, %v825
    %v827 = vpop.f32.mrb[0].mxu0
    %v828 = vpop.f32.mrb[0].mxu0
    %829 = vdwg.mxu0
    %v830 = vld [vmem:[%s12] sm:$0xff]
    %832 = vset.pattern.permute.xlu0 0
    %833 = vperm.xlu0 %832, %v830
    %v834 = vpop.permute.xlu0 %833
    %v836 = vmul.f32 %v783, %v834
    %v837 = vmul.f32 %v785, %v834
    %v838 = vmul.f32 %v824, %v834
    %v839 = vmul.f32 %v826, %v834
    %v840 = vld [vmem:[%s13] sm:$0xff]
    %842 = vset.pattern.permute.xlu0 0
    %843 = vperm.xlu0 %842, %v840
    %v844 = vpop.permute.xlu0 %843
    %v846 = vadd.f32 %v836, %v844
    %v847 = vadd.f32 %v837, %v844
    %v848 = vadd.f32 %v838, %v844
    %v849 = vadd.f32 %v839, %v844
    %v850 = vmax.f32 %v846, 0.0
    %v851 = vmax.f32 %v847, 0.0
    %v852 = vmax.f32 %v848, 0.0
    %v853 = vmax.f32 %v849, 0.0
    %854 = vrot.lane.b32.xlu0 %v850, 17
    %v855 = vpop.permute.xlu0 %854
    %856 = vrot.lane.b32.xlu0 %v851, 17
    %v857 = vpop.permute.xlu0 %856
    %858 = vrot.lane.b32.xlu0 %v852, 17
    %v859 = vpop.permute.xlu0 %858
    %860 = vrot.lane.b32.xlu0 %v853, 17
    %v861 = vpop.permute.xlu0 %860
    %v862 = vsel %vm249, %v859, %v861
    %v863 = vsel %vm249, %v857, %v859
    %v864 = vsel %vm249, %v855, %v857
    %v865 = vsel %vm249, %v861, %v855
    %v866 = vld [vmem:[%s1] ss:$8 sm:$0xf]
    %v868 = vlaneseq
    %v869 = vshrl.u32 %v868, 7
    %v870 = vsub.s32 0, %v869
    %v871 = vrot.slane %v866, %v870
    %v872 = vlaneseq
    %v873 = vshrl.u32 %v872, 7
    %v874 = vsub.s32 1, %v873
    %v875 = vrot.slane %v866, %v874
    %v876 = vlaneseq
    %v877 = vshrl.u32 %v876, 7
    %v878 = vsub.s32 2, %v877
    %v879 = vrot.slane %v866, %v878
    %v880 = vlaneseq
    %v881 = vshrl.u32 %v880, 7
    %v882 = vsub.s32 3, %v881
    %v883 = vrot.slane %v866, %v882
    %v888 = vmul.f32 %v865, %v871
    %v889 = vmul.f32 %v864, %v875
    %v890 = vmul.f32 %v863, %v879
    %v891 = vmul.f32 %v862, %v883
    %892 = vrot.lane.b32.xlu0 %v850, 16
    %v893 = vpop.permute.xlu0 %892
    %894 = vrot.lane.b32.xlu0 %v851, 16
    %v895 = vpop.permute.xlu0 %894
    %896 = vrot.lane.b32.xlu0 %v852, 16
    %v897 = vpop.permute.xlu0 %896
    %898 = vrot.lane.b32.xlu0 %v853, 16
    %v899 = vpop.permute.xlu0 %898
    %v900 = vsel %vm288, %v897, %v899
    %v901 = vsel %vm288, %v895, %v897
    %v902 = vsel %vm288, %v893, %v895
    %v903 = vsel %vm288, %v899, %v893
    %v904 = vld [vmem:[%s293] ss:$8 sm:$0xf]
    %v906 = vlaneseq
    %v907 = vshrl.u32 %v906, 7
    %v908 = vsub.s32 0, %v907
    %v909 = vrot.slane %v904, %v908
    %v910 = vlaneseq
    %v911 = vshrl.u32 %v910, 7
    %v912 = vsub.s32 1, %v911
    %v913 = vrot.slane %v904, %v912
    %v914 = vlaneseq
    %v915 = vshrl.u32 %v914, 7
    %v916 = vsub.s32 2, %v915
    %v917 = vrot.slane %v904, %v916
    %v918 = vlaneseq
    %v919 = vshrl.u32 %v918, 7
    %v920 = vsub.s32 3, %v919
    %v921 = vrot.slane %v904, %v920
    %v926 = vmul.f32 %v903, %v909
    %v927 = vmul.f32 %v902, %v913
    %v928 = vmul.f32 %v901, %v917
    %v929 = vmul.f32 %v900, %v921
    %930 = vrot.lane.b32.xlu0 %v850, 15
    %v931 = vpop.permute.xlu0 %930
    %932 = vrot.lane.b32.xlu0 %v851, 15
    %v933 = vpop.permute.xlu0 %932
    %934 = vrot.lane.b32.xlu0 %v852, 15
    %v935 = vpop.permute.xlu0 %934
    %936 = vrot.lane.b32.xlu0 %v853, 15
    %v937 = vpop.permute.xlu0 %936
    %v938 = vsel %vm328, %v935, %v937
    %v939 = vsel %vm328, %v933, %v935
    %v940 = vsel %vm328, %v931, %v933
    %v941 = vsel %vm328, %v937, %v931
    %v942 = vld [vmem:[%s333] ss:$8 sm:$0xf]
    %v944 = vlaneseq
    %v945 = vshrl.u32 %v944, 7
    %v946 = vsub.s32 0, %v945
    %v947 = vrot.slane %v942, %v946
    %v948 = vlaneseq
    %v949 = vshrl.u32 %v948, 7
    %v950 = vsub.s32 1, %v949
    %v951 = vrot.slane %v942, %v950
    %v952 = vlaneseq
    %v953 = vshrl.u32 %v952, 7
    %v954 = vsub.s32 2, %v953
    %v955 = vrot.slane %v942, %v954
    %v956 = vlaneseq
    %v957 = vshrl.u32 %v956, 7
    %v958 = vsub.s32 3, %v957
    %v959 = vrot.slane %v942, %v958
    %v964 = vmul.f32 %v941, %v947
    %v965 = vmul.f32 %v940, %v951
    %v966 = vmul.f32 %v939, %v955
    %v967 = vmul.f32 %v938, %v959
    %968 = vrot.lane.b32.xlu0 %v850, 1
    %v969 = vpop.permute.xlu0 %968
    %970 = vrot.lane.b32.xlu0 %v851, 1
    %v971 = vpop.permute.xlu0 %970
    %972 = vrot.lane.b32.xlu0 %v852, 1
    %v973 = vpop.permute.xlu0 %972
    %974 = vrot.lane.b32.xlu0 %v853, 1
    %v975 = vpop.permute.xlu0 %974
    %v976 = vsel %vm368, %v973, %v975
    %v977 = vsel %vm368, %v971, %v973
    %v978 = vsel %vm368, %v969, %v971
    %v979 = vsel %vm368, %v975, %v969
    %v980 = vld [vmem:[%s373] ss:$8 sm:$0xf]
    %v982 = vlaneseq
    %v983 = vshrl.u32 %v982, 7
    %v984 = vsub.s32 0, %v983
    %v985 = vrot.slane %v980, %v984
    %v986 = vlaneseq
    %v987 = vshrl.u32 %v986, 7
    %v988 = vsub.s32 1, %v987
    %v989 = vrot.slane %v980, %v988
    %v990 = vlaneseq
    %v991 = vshrl.u32 %v990, 7
    %v992 = vsub.s32 2, %v991
    %v993 = vrot.slane %v980, %v992
    %v994 = vlaneseq
    %v995 = vshrl.u32 %v994, 7
    %v996 = vsub.s32 3, %v995
    %v997 = vrot.slane %v980, %v996
    %v1002 = vmul.f32 %v979, %v985
    %v1003 = vmul.f32 %v978, %v989
    %v1004 = vmul.f32 %v977, %v993
    %v1005 = vmul.f32 %v976, %v997
    %1006 = vrot.lane.b32.xlu0 %v850, 127
    %v1007 = vpop.permute.xlu0 %1006
    %1008 = vrot.lane.b32.xlu0 %v851, 127
    %v1009 = vpop.permute.xlu0 %1008
    %1010 = vrot.lane.b32.xlu0 %v852, 127
    %v1011 = vpop.permute.xlu0 %1010
    %1012 = vrot.lane.b32.xlu0 %v853, 127
    %v1013 = vpop.permute.xlu0 %1012
    %v1014 = vsel %vm408, %v1011, %v1013
    %v1015 = vsel %vm408, %v1009, %v1011
    %v1016 = vsel %vm408, %v1007, %v1009
    %v1017 = vsel %vm408, %v1013, %v1007
    %v1018 = vld [vmem:[%s413] ss:$8 sm:$0xf]
    %v1020 = vlaneseq
    %v1021 = vshrl.u32 %v1020, 7
    %v1022 = vsub.s32 0, %v1021
    %v1023 = vrot.slane %v1018, %v1022
    %v1024 = vlaneseq
    %v1025 = vshrl.u32 %v1024, 7
    %v1026 = vsub.s32 1, %v1025
    %v1027 = vrot.slane %v1018, %v1026
    %v1028 = vlaneseq
    %v1029 = vshrl.u32 %v1028, 7
    %v1030 = vsub.s32 2, %v1029
    %v1031 = vrot.slane %v1018, %v1030
    %v1032 = vlaneseq
    %v1033 = vshrl.u32 %v1032, 7
    %v1034 = vsub.s32 3, %v1033
    %v1035 = vrot.slane %v1018, %v1034
    %v1040 = vmul.f32 %v1016, %v1023
    %v1041 = vmul.f32 %v1015, %v1027
    %v1042 = vmul.f32 %v1014, %v1031
    %v1043 = vmul.f32 %v1017, %v1035
    %1044 = vrot.lane.b32.xlu0 %v850, 113
    %v1045 = vpop.permute.xlu0 %1044
    %1046 = vrot.lane.b32.xlu0 %v851, 113
    %v1047 = vpop.permute.xlu0 %1046
    %1048 = vrot.lane.b32.xlu0 %v852, 113
    %v1049 = vpop.permute.xlu0 %1048
    %1050 = vrot.lane.b32.xlu0 %v853, 113
    %v1051 = vpop.permute.xlu0 %1050
    %v1052 = vsel %vm448, %v1049, %v1051
    %v1053 = vsel %vm448, %v1047, %v1049
    %v1054 = vsel %vm448, %v1045, %v1047
    %v1055 = vsel %vm448, %v1051, %v1045
    %v1056 = vld [vmem:[%s453] ss:$8 sm:$0xf]
    %v1058 = vlaneseq
    %v1059 = vshrl.u32 %v1058, 7
    %v1060 = vsub.s32 0, %v1059
    %v1061 = vrot.slane %v1056, %v1060
    %v1062 = vlaneseq
    %v1063 = vshrl.u32 %v1062, 7
    %v1064 = vsub.s32 1, %v1063
    %v1065 = vrot.slane %v1056, %v1064
    %v1066 = vlaneseq
    %v1067 = vshrl.u32 %v1066, 7
    %v1068 = vsub.s32 2, %v1067
    %v1069 = vrot.slane %v1056, %v1068
    %v1070 = vlaneseq
    %v1071 = vshrl.u32 %v1070, 7
    %v1072 = vsub.s32 3, %v1071
    %v1073 = vrot.slane %v1056, %v1072
    %v1078 = vmul.f32 %v1054, %v1061
    %v1079 = vmul.f32 %v1053, %v1065
    %v1080 = vmul.f32 %v1052, %v1069
    %v1081 = vmul.f32 %v1055, %v1073
    %1082 = vrot.lane.b32.xlu0 %v850, 112
    %v1083 = vpop.permute.xlu0 %1082
    %1084 = vrot.lane.b32.xlu0 %v851, 112
    %v1085 = vpop.permute.xlu0 %1084
    %1086 = vrot.lane.b32.xlu0 %v852, 112
    %v1087 = vpop.permute.xlu0 %1086
    %1088 = vrot.lane.b32.xlu0 %v853, 112
    %v1089 = vpop.permute.xlu0 %1088
    %v1090 = vsel %vm488, %v1087, %v1089
    %v1091 = vsel %vm488, %v1085, %v1087
    %v1092 = vsel %vm488, %v1083, %v1085
    %v1093 = vsel %vm488, %v1089, %v1083
    %v1094 = vld [vmem:[%s493] ss:$8 sm:$0xf]
    %v1096 = vlaneseq
    %v1097 = vshrl.u32 %v1096, 7
    %v1098 = vsub.s32 0, %v1097
    %v1099 = vrot.slane %v1094, %v1098
    %v1100 = vlaneseq
    %v1101 = vshrl.u32 %v1100, 7
    %v1102 = vsub.s32 1, %v1101
    %v1103 = vrot.slane %v1094, %v1102
    %v1104 = vlaneseq
    %v1105 = vshrl.u32 %v1104, 7
    %v1106 = vsub.s32 2, %v1105
    %v1107 = vrot.slane %v1094, %v1106
    %v1108 = vlaneseq
    %v1109 = vshrl.u32 %v1108, 7
    %v1110 = vsub.s32 3, %v1109
    %v1111 = vrot.slane %v1094, %v1110
    %v1116 = vmul.f32 %v1092, %v1099
    %v1117 = vmul.f32 %v1091, %v1103
    %v1118 = vmul.f32 %v1090, %v1107
    %v1119 = vmul.f32 %v1093, %v1111
    %1120 = vrot.lane.b32.xlu0 %v850, 111
    %v1121 = vpop.permute.xlu0 %1120
    %1122 = vrot.lane.b32.xlu0 %v851, 111
    %v1123 = vpop.permute.xlu0 %1122
    %1124 = vrot.lane.b32.xlu0 %v852, 111
    %v1125 = vpop.permute.xlu0 %1124
    %1126 = vrot.lane.b32.xlu0 %v853, 111
    %v1127 = vpop.permute.xlu0 %1126
    %v1128 = vsel %vm528, %v1125, %v1127
    %v1129 = vsel %vm528, %v1123, %v1125
    %v1130 = vsel %vm528, %v1121, %v1123
    %v1131 = vsel %vm528, %v1127, %v1121
    %v1132 = vld [vmem:[%s533] ss:$8 sm:$0xf]
    %v1134 = vlaneseq
    %v1135 = vshrl.u32 %v1134, 7
    %v1136 = vsub.s32 0, %v1135
    %v1137 = vrot.slane %v1132, %v1136
    %v1138 = vlaneseq
    %v1139 = vshrl.u32 %v1138, 7
    %v1140 = vsub.s32 1, %v1139
    %v1141 = vrot.slane %v1132, %v1140
    %v1142 = vlaneseq
    %v1143 = vshrl.u32 %v1142, 7
    %v1144 = vsub.s32 2, %v1143
    %v1145 = vrot.slane %v1132, %v1144
    %v1146 = vlaneseq
    %v1147 = vshrl.u32 %v1146, 7
    %v1148 = vsub.s32 3, %v1147
    %v1149 = vrot.slane %v1132, %v1148
    %v1154 = vmul.f32 %v1130, %v1137
    %v1155 = vmul.f32 %v1129, %v1141
    %v1156 = vmul.f32 %v1128, %v1145
    %v1157 = vmul.f32 %v1131, %v1149
    %v1158 = vld [vmem:[%s14] sm:$0xf]
    %v1159 = vpack.c.bf16 %v926, %v888
    %v1160 = vpack.c.bf16 %v927, %v889
    %v1161 = vpack.c.bf16 %v928, %v890
    %v1162 = vpack.c.bf16 %v929, %v891
    %v1163 = vpack.c.bf16 %v1002, %v964
    %v1164 = vpack.c.bf16 %v1003, %v965
    %v1165 = vpack.c.bf16 %v1004, %v966
    %v1166 = vpack.c.bf16 %v1005, %v967
    %v1167 = vpack.c.bf16 %v1040, %v850
    %v1168 = vpack.c.bf16 %v1041, %v851
    %v1169 = vpack.c.bf16 %v1042, %v852
    %v1170 = vpack.c.bf16 %v1043, %v853
    %v1171 = vpack.c.bf16 %v1116, %v1078
    %v1172 = vpack.c.bf16 %v1117, %v1079
    %v1173 = vpack.c.bf16 %v1118, %v1080
    %v1174 = vpack.c.bf16 %v1119, %v1081
    %v1175 = vpack.c.bf16 %v1154, %v1154
    %v1176 = vpack.c.bf16 %v1155, %v1155
    %v1177 = vpack.c.bf16 %v1156, %v1156
    %v1178 = vpack.c.bf16 %v1157, %v1157
    %v1180 = vsel %vm581, %v1158, 0
    %v1183 = vsel %vm120, %v1175, 0
    %v1186 = vsel %vm120, %v1176, 0
    %v1189 = vsel %vm120, %v1177, 0
    %v1192 = vsel %vm120, %v1178, 0
    %1194 = vmatprep.subr.bf16.mxu0 %v1160
    %1195 = vmatpush1.bf16.msra.mxu0 %v1159
    %1196 = vmatprep.subr.bf16.mxu0 %v1164
    %1197 = vmatpush1.bf16.msra.mxu0 %v1163
    %1198 = vmatprep.subr.bf16.mxu0 %v1168
    %1199 = vmatpush1.bf16.msra.mxu0 %v1167
    %1200 = vmatprep.subr.bf16.mxu0 %v1172
    %1201 = vmatpush1.bf16.msra.mxu0 %v1171
    %1202 = vmatprep.subr.bf16.mxu0 %v1186
    %1203 = vmatpush1.bf16.msra.mxu0 %v1183
    %1204 = vmatprep.subr.bf16.mxu0 0
    %1205 = vmatpush1.bf16.msra.mxu0 0
    %1206 = vmatprep.subr.bf16.mxu0 0
    %1207 = vmatpush1.bf16.msra.mxu0 0
    %1208 = vmatprep.subr.bf16.mxu0 0
    %1209 = vmatpush1.bf16.msra.mxu0 0
    %1210 = vmatprep.subr.bf16.mxu0 0
    %1211 = vmatpush1.bf16.msra.mxu0 0
    %1212 = vmatprep.subr.bf16.mxu0 0
    %1213 = vmatpush1.bf16.msra.mxu0 0
    %1214 = vmatprep.subr.bf16.mxu0 0
    %1215 = vmatpush1.bf16.msra.mxu0 0
    %1216 = vmatprep.subr.bf16.mxu0 0
    %1217 = vmatpush1.bf16.msra.mxu0 0
    %1218 = vmatprep.subr.bf16.mxu0 0
    %1219 = vmatpush1.bf16.msra.mxu0 0
    %1220 = vmatprep.subr.bf16.mxu0 0
    %1221 = vmatpush1.bf16.msra.mxu0 0
    %1222 = vmatprep.subr.bf16.mxu0 0
    %1223 = vmatpush1.bf16.msra.mxu0 0
    %1224 = vmatprep.subr.bf16.mxu0 0
    %1225 = vmatpush1.bf16.msra.mxu0 0
    %1226 = vmatprep.mubr.bf16.mxu0 0
    %1227 = vmatmul.mubr.bf16.gmra.mrb[0].mxu0 %v1180
    %v1228 = vpop.f32.mrb[0].mxu0
    %v1229 = vadd.f32 0.0, %v1228
    %v1230 = vpop.f32.mrb[0].mxu0
    %v1231 = vadd.f32 0.0, %v1230
    %v1232 = vpop.f32.mrb[0].mxu0
    %v1233 = vpop.f32.mrb[0].mxu0
    %1234 = vdwg.mxu0
    %1235 = vmatprep.subr.bf16.mxu0 %v1162
    %1236 = vmatpush1.bf16.msra.mxu0 %v1161
    %1237 = vmatprep.subr.bf16.mxu0 %v1166
    %1238 = vmatpush1.bf16.msra.mxu0 %v1165
    %1239 = vmatprep.subr.bf16.mxu0 %v1170
    %1240 = vmatpush1.bf16.msra.mxu0 %v1169
    %1241 = vmatprep.subr.bf16.mxu0 %v1174
    %1242 = vmatpush1.bf16.msra.mxu0 %v1173
    %1243 = vmatprep.subr.bf16.mxu0 %v1192
    %1244 = vmatpush1.bf16.msra.mxu0 %v1189
    %1245 = vmatprep.subr.bf16.mxu0 0
    %1246 = vmatpush1.bf16.msra.mxu0 0
    %1247 = vmatprep.subr.bf16.mxu0 0
    %1248 = vmatpush1.bf16.msra.mxu0 0
    %1249 = vmatprep.subr.bf16.mxu0 0
    %1250 = vmatpush1.bf16.msra.mxu0 0
    %1251 = vmatprep.subr.bf16.mxu0 0
    %1252 = vmatpush1.bf16.msra.mxu0 0
    %1253 = vmatprep.subr.bf16.mxu0 0
    %1254 = vmatpush1.bf16.msra.mxu0 0
    %1255 = vmatprep.subr.bf16.mxu0 0
    %1256 = vmatpush1.bf16.msra.mxu0 0
    %1257 = vmatprep.subr.bf16.mxu0 0
    %1258 = vmatpush1.bf16.msra.mxu0 0
    %1259 = vmatprep.subr.bf16.mxu0 0
    %1260 = vmatpush1.bf16.msra.mxu0 0
    %1261 = vmatprep.subr.bf16.mxu0 0
    %1262 = vmatpush1.bf16.msra.mxu0 0
    %1263 = vmatprep.subr.bf16.mxu0 0
    %1264 = vmatpush1.bf16.msra.mxu0 0
    %1265 = vmatprep.subr.bf16.mxu0 0
    %1266 = vmatpush1.bf16.msra.mxu0 0
    %1267 = vmatprep.mubr.bf16.mxu0 0
    %1268 = vmatmul.mubr.bf16.gmra.mrb[0].mxu0 %v1180
    %v1269 = vpop.f32.mrb[0].mxu0
    %v1270 = vadd.f32 0.0, %v1269
    %v1271 = vpop.f32.mrb[0].mxu0
    %v1272 = vadd.f32 0.0, %v1271
    %v1273 = vpop.f32.mrb[0].mxu0
    %v1274 = vpop.f32.mrb[0].mxu0
    %1275 = vdwg.mxu0
    %1276 = vst [vmem:[#allocation2 + $0x40] sm:$0xff] %v1229
    %1277 = vst [vmem:[#allocation2 + $0x48] sm:$0xff] %v1231
    %1278 = vst [vmem:[#allocation2 + $0x50] sm:$0xff] %v1270
    %1279 = vst [vmem:[#allocation2 + $0x58] sm:$0xff] %v1272
    %v1280 = vld [vmem:[#allocation2] sm:$0xff]
    %v1281 = vld [vmem:[#allocation2 + $0x8] sm:$0xff]
    %v1282 = vld [vmem:[#allocation2 + $0x10] sm:$0xff]
    %v1283 = vld [vmem:[#allocation2 + $0x18] sm:$0xff]
    %v1284 = vld [vmem:[#allocation2 + $0x20] sm:$0xff]
    %v1285 = vld [vmem:[#allocation2 + $0x28] sm:$0xff]
    %v1286 = vld [vmem:[#allocation2 + $0x30] sm:$0xff]
    %v1287 = vld [vmem:[#allocation2 + $0x38] sm:$0xff]
    %v1288 = vld [vmem:[#allocation2 + $0x40] sm:$0xff]
    %v1289 = vld [vmem:[#allocation2 + $0x48] sm:$0xff]
    %v1290 = vld [vmem:[#allocation2 + $0x50] sm:$0xff]
    %v1291 = vld [vmem:[#allocation2 + $0x58] sm:$0xff]
    %v1292 = vld [vmem:[%s15] sm:$0xff]
    %v1293 = vld [vmem:[%s15 + $0x8] sm:$0xff]
    %v1294 = vld [vmem:[%s15 + $0x10] sm:$0xff]
    %1296 = vset.pattern.permute.xlu0 0
    %1297 = vperm.xlu0 %1296, %v1292
    %v1298 = vpop.permute.xlu0 %1297
    %1301 = vset.pattern.permute.xlu0 0
    %1302 = vperm.xlu0 %1301, %v1293
    %v1303 = vpop.permute.xlu0 %1302
    %1306 = vset.pattern.permute.xlu0 0
    %1307 = vperm.xlu0 %1306, %v1294
    %v1308 = vpop.permute.xlu0 %1307
    %v1310 = vmul.f32 %v1280, %v1298
    %v1311 = vmul.f32 %v1281, %v1298
    %v1312 = vmul.f32 %v1282, %v1298
    %v1313 = vmul.f32 %v1283, %v1298
    %v1314 = vmul.f32 %v1284, %v1303
    %v1315 = vmul.f32 %v1285, %v1303
    %v1316 = vmul.f32 %v1286, %v1303
    %v1317 = vmul.f32 %v1287, %v1303
    %v1318 = vmul.f32 %v1288, %v1308
    %v1319 = vmul.f32 %v1289, %v1308
    %v1320 = vmul.f32 %v1290, %v1308
    %v1321 = vmul.f32 %v1291, %v1308
    %v1322 = vld [vmem:[%s16] sm:$0xff]
    %v1323 = vld [vmem:[%s16 + $0x8] sm:$0xff]
    %v1324 = vld [vmem:[%s16 + $0x10] sm:$0xff]
    %1326 = vset.pattern.permute.xlu0 0
    %1327 = vperm.xlu0 %1326, %v1322
    %v1328 = vpop.permute.xlu0 %1327
    %1331 = vset.pattern.permute.xlu0 0
    %1332 = vperm.xlu0 %1331, %v1323
    %v1333 = vpop.permute.xlu0 %1332
    %1336 = vset.pattern.permute.xlu0 0
    %1337 = vperm.xlu0 %1336, %v1324
    %v1338 = vpop.permute.xlu0 %1337
    %v1340 = vadd.f32 %v1310, %v1328
    %v1341 = vadd.f32 %v1311, %v1328
    %v1342 = vadd.f32 %v1312, %v1328
    %v1343 = vadd.f32 %v1313, %v1328
    %v1344 = vadd.f32 %v1314, %v1333
    %v1345 = vadd.f32 %v1315, %v1333
    %v1346 = vadd.f32 %v1316, %v1333
    %v1347 = vadd.f32 %v1317, %v1333
    %v1348 = vadd.f32 %v1318, %v1338
    %v1349 = vadd.f32 %v1319, %v1338
    %v1350 = vadd.f32 %v1320, %v1338
    %v1351 = vadd.f32 %v1321, %v1338
    %v1352 = vmax.f32 %v1340, 0.0
    %v1353 = vmax.f32 %v1341, 0.0
    %v1354 = vmax.f32 %v1342, 0.0
    %v1355 = vmax.f32 %v1343, 0.0
    %v1356 = vmax.f32 %v1344, 0.0
    %v1357 = vmax.f32 %v1345, 0.0
    %v1358 = vmax.f32 %v1346, 0.0
    %v1359 = vmax.f32 %v1347, 0.0
    %v1360 = vmax.f32 %v1348, 0.0
    %v1361 = vmax.f32 %v1349, 0.0
    %v1362 = vmax.f32 %v1350, 0.0
    %v1363 = vmax.f32 %v1351, 0.0
    %v1364 = vld [vmem:[%s17] sm:$0xf]
    %v1365 = vpack.c.bf16 %v1356, %v1352
    %v1366 = vpack.c.bf16 %v1357, %v1353
    %v1367 = vpack.c.bf16 %v1358, %v1354
    %v1368 = vpack.c.bf16 %v1359, %v1355
    %v1369 = vpack.c.bf16 %v1360, %v1360
    %v1370 = vpack.c.bf16 %v1361, %v1361
    %v1371 = vpack.c.bf16 %v1362, %v1362
    %v1372 = vpack.c.bf16 %v1363, %v1363
    %vm1373 = vcmask 195584
    %v1375 = vsel %vm1373, %v1364, 0
    %v1378 = vsel %vm120, %v1369, 0
    %v1381 = vsel %vm120, %v1370, 0
    %v1384 = vsel %vm120, %v1371, 0
    %v1387 = vsel %vm120, %v1372, 0
    %1389 = vmatprep.subr.bf16.mxu0 %v1366
    %1390 = vmatpush1.bf16.msra.mxu0 %v1365
    %1391 = vmatprep.subr.bf16.mxu0 %v1381
    %1392 = vmatpush1.bf16.msra.mxu0 %v1378
    %1393 = vmatprep.subr.bf16.mxu0 0
    %1394 = vmatpush1.bf16.msra.mxu0 0
    %1395 = vmatprep.subr.bf16.mxu0 0
    %1396 = vmatpush1.bf16.msra.mxu0 0
    %1397 = vmatprep.subr.bf16.mxu0 0
    %1398 = vmatpush1.bf16.msra.mxu0 0
    %1399 = vmatprep.subr.bf16.mxu0 0
    %1400 = vmatpush1.bf16.msra.mxu0 0
    %1401 = vmatprep.subr.bf16.mxu0 0
    %1402 = vmatpush1.bf16.msra.mxu0 0
    %1403 = vmatprep.subr.bf16.mxu0 0
    %1404 = vmatpush1.bf16.msra.mxu0 0
    %1405 = vmatprep.subr.bf16.mxu0 0
    %1406 = vmatpush1.bf16.msra.mxu0 0
    %1407 = vmatprep.subr.bf16.mxu0 0
    %1408 = vmatpush1.bf16.msra.mxu0 0
    %1409 = vmatprep.subr.bf16.mxu0 0
    %1410 = vmatpush1.bf16.msra.mxu0 0
    %1411 = vmatprep.subr.bf16.mxu0 0
    %1412 = vmatpush1.bf16.msra.mxu0 0
    %1413 = vmatprep.subr.bf16.mxu0 0
    %1414 = vmatpush1.bf16.msra.mxu0 0
    %1415 = vmatprep.subr.bf16.mxu0 0
    %1416 = vmatpush1.bf16.msra.mxu0 0
    %1417 = vmatprep.subr.bf16.mxu0 0
    %1418 = vmatpush1.bf16.msra.mxu0 0
    %1419 = vmatprep.subr.bf16.mxu0 0
    %1420 = vmatpush1.bf16.msra.mxu0 0
    %1421 = vmatprep.mubr.bf16.mxu0 0
    %1422 = vmatmul.mubr.bf16.gmra.mrb[0].mxu0 %v1375
    %v1423 = vpop.f32.mrb[0].mxu0
    %v1424 = vadd.f32 0.0, %v1423
    %v1425 = vpop.f32.mrb[0].mxu0
    %v1426 = vadd.f32 0.0, %v1425
    %v1427 = vpop.f32.mrb[0].mxu0
    %v1428 = vpop.f32.mrb[0].mxu0
    %1429 = vdwg.mxu0
    %1430 = vmatprep.subr.bf16.mxu0 %v1368
    %1431 = vmatpush1.bf16.msra.mxu0 %v1367
    %1432 = vmatprep.subr.bf16.mxu0 %v1387
    %1433 = vmatpush1.bf16.msra.mxu0 %v1384
    %1434 = vmatprep.subr.bf16.mxu0 0
    %1435 = vmatpush1.bf16.msra.mxu0 0
    %1436 = vmatprep.subr.bf16.mxu0 0
    %1437 = vmatpush1.bf16.msra.mxu0 0
    %1438 = vmatprep.subr.bf16.mxu0 0
    %1439 = vmatpush1.bf16.msra.mxu0 0
    %1440 = vmatprep.subr.bf16.mxu0 0
    %1441 = vmatpush1.bf16.msra.mxu0 0
    %1442 = vmatprep.subr.bf16.mxu0 0
    %1443 = vmatpush1.bf16.msra.mxu0 0
    %1444 = vmatprep.subr.bf16.mxu0 0
    %1445 = vmatpush1.bf16.msra.mxu0 0
    %1446 = vmatprep.subr.bf16.mxu0 0
    %1447 = vmatpush1.bf16.msra.mxu0 0
    %1448 = vmatprep.subr.bf16.mxu0 0
    %1449 = vmatpush1.bf16.msra.mxu0 0
    %1450 = vmatprep.subr.bf16.mxu0 0
    %1451 = vmatpush1.bf16.msra.mxu0 0
    %1452 = vmatprep.subr.bf16.mxu0 0
    %1453 = vmatpush1.bf16.msra.mxu0 0
    %1454 = vmatprep.subr.bf16.mxu0 0
    %1455 = vmatpush1.bf16.msra.mxu0 0
    %1456 = vmatprep.subr.bf16.mxu0 0
    %1457 = vmatpush1.bf16.msra.mxu0 0
    %1458 = vmatprep.subr.bf16.mxu0 0
    %1459 = vmatpush1.bf16.msra.mxu0 0
    %1460 = vmatprep.subr.bf16.mxu0 0
    %1461 = vmatpush1.bf16.msra.mxu0 0
    %1462 = vmatprep.mubr.bf16.mxu0 0
    %1463 = vmatmul.mubr.bf16.gmra.mrb[0].mxu0 %v1375
    %v1464 = vpop.f32.mrb[0].mxu0
    %v1465 = vadd.f32 0.0, %v1464
    %v1466 = vpop.f32.mrb[0].mxu0
    %v1467 = vadd.f32 0.0, %v1466
    %v1468 = vpop.f32.mrb[0].mxu0
    %v1469 = vpop.f32.mrb[0].mxu0
    %1470 = vdwg.mxu0
    %v1471 = vld [vmem:[#allocation3] sm:$0xff]
    %v1472 = vld [vmem:[#allocation3 + $0x8] sm:$0xff]
    %v1473 = vld [vmem:[#allocation3 + $0x10] sm:$0xff]
    %v1474 = vld [vmem:[#allocation3 + $0x18] sm:$0xff]
    %v1475 = vld [vmem:[#allocation3 + $0x20] sm:$0xff]
    %v1476 = vld [vmem:[#allocation3 + $0x28] sm:$0xff]
    %v1477 = vld [vmem:[#allocation3 + $0x30] sm:$0xff]
    %v1478 = vld [vmem:[#allocation3 + $0x38] sm:$0xff]
    %v1479 = vld [vmem:[#allocation3 + $0x40] sm:$0xff]
    %v1480 = vld [vmem:[#allocation3 + $0x48] sm:$0xff]
    %v1481 = vld [vmem:[#allocation3 + $0x50] sm:$0xff]
    %v1482 = vld [vmem:[#allocation3 + $0x58] sm:$0xff]
    %v1483 = vld [vmem:[#allocation3 + $0x60] sm:$0xff]
    %v1484 = vld [vmem:[#allocation3 + $0x68] sm:$0xff]
    %v1485 = vld [vmem:[#allocation3 + $0x70] sm:$0xff]
    %v1486 = vld [vmem:[#allocation3 + $0x78] sm:$0xff]
    %v1487 = vld [vmem:[#allocation3 + $0x80] sm:$0xff]
    %v1488 = vld [vmem:[#allocation3 + $0x88] sm:$0xff]
    %v1489 = vld [vmem:[#allocation3 + $0x90] sm:$0xff]
    %v1490 = vld [vmem:[#allocation3 + $0x98] sm:$0xff]
    %v1491 = vld [vmem:[#allocation3 + $0xa0] sm:$0xff]
    %v1492 = vld [vmem:[#allocation3 + $0xa8] sm:$0xff]
    %v1493 = vld [vmem:[#allocation3 + $0xb0] sm:$0xff]
    %v1494 = vld [vmem:[#allocation3 + $0xb8] sm:$0xff]
    %v1495 = vld [vmem:[#allocation3 + $0xc0] sm:$0xff]
    %v1496 = vld [vmem:[#allocation3 + $0xc8] sm:$0xff]
    %v1497 = vld [vmem:[#allocation3 + $0xd0] sm:$0xff]
    %v1498 = vld [vmem:[#allocation3 + $0xd8] sm:$0xff]
    %v1499 = vld [vmem:[#allocation3 + $0xe0] sm:$0xff]
    %v1500 = vld [vmem:[#allocation3 + $0xe8] sm:$0xff]
    %v1501 = vld [vmem:[#allocation3 + $0xf0] sm:$0xff]
    %v1502 = vld [vmem:[#allocation3 + $0xf8] sm:$0xff]
    %v1503 = vld [vmem:[#allocation3 + $0x100] sm:$0xff]
    %v1504 = vld [vmem:[#allocation3 + $0x108] sm:$0xff]
    %v1505 = vld [vmem:[#allocation3 + $0x110] sm:$0xff]
    %v1506 = vld [vmem:[#allocation3 + $0x118] sm:$0xff]
    %v1507 = vld [vmem:[#allocation3 + $0x120] sm:$0xff]
    %v1508 = vld [vmem:[#allocation3 + $0x128] sm:$0xff]
    %v1509 = vld [vmem:[#allocation3 + $0x130] sm:$0xff]
    %v1510 = vld [vmem:[#allocation3 + $0x138] sm:$0xff]
    %v1511 = vld [vmem:[#allocation3 + $0x140] sm:$0xff]
    %v1512 = vld [vmem:[#allocation3 + $0x148] sm:$0xff]
    %v1513 = vld [vmem:[#allocation3 + $0x150] sm:$0xff]
    %v1514 = vld [vmem:[#allocation3 + $0x158] sm:$0xff]
    %v1515 = vld [vmem:[#allocation3 + $0x160] sm:$0xff]
    %v1516 = vld [vmem:[#allocation3 + $0x168] sm:$0xff]
    %v1517 = vld [vmem:[#allocation3 + $0x170] sm:$0xff]
    %v1518 = vld [vmem:[#allocation3 + $0x178] sm:$0xff]
    %v1519 = vld [vmem:[#allocation3 + $0x180] sm:$0xff]
    %v1520 = vld [vmem:[#allocation3 + $0x188] sm:$0xff]
    %v1521 = vld [vmem:[#allocation3 + $0x190] sm:$0xff]
    %v1522 = vld [vmem:[#allocation3 + $0x198] sm:$0xff]
    %v1523 = vld [vmem:[#allocation3 + $0x1a0] sm:$0xff]
    %v1524 = vld [vmem:[#allocation3 + $0x1a8] sm:$0xff]
    %v1525 = vld [vmem:[#allocation3 + $0x1b0] sm:$0xff]
    %v1526 = vld [vmem:[#allocation3 + $0x1b8] sm:$0xff]
    %v1527 = vld [vmem:[#allocation3 + $0x1c0] sm:$0xff]
    %v1528 = vld [vmem:[#allocation3 + $0x1c8] sm:$0xff]
    %v1529 = vld [vmem:[#allocation3 + $0x1d0] sm:$0xff]
    %v1530 = vld [vmem:[#allocation3 + $0x1d8] sm:$0xff]
    %v1531 = vld [vmem:[#allocation3 + $0x1e0] sm:$0xff]
    %v1532 = vld [vmem:[#allocation3 + $0x1e8] sm:$0xff]
    %v1533 = vld [vmem:[#allocation3 + $0x1f0] sm:$0xff]
    %v1534 = vld [vmem:[#allocation3 + $0x1f8] sm:$0xff]
    %1535 = vmatprep.subr.mxu0 0.0
    %1536 = vmatpush1.msra.mxu0 %v1471
    %1537 = vmatprep.subr.mxu0 0.0
    %1538 = vmatpush1.msra.mxu0 %v1472
    %1539 = vmatprep.subr.mxu0 0.0
    %1540 = vmatpush1.msra.mxu0 %v1473
    %1541 = vmatprep.subr.mxu0 0.0
    %1542 = vmatpush1.msra.mxu0 %v1474
    %1543 = vmatprep.subr.mxu0 0.0
    %1544 = vmatpush1.msra.mxu0 %v1475
    %1545 = vmatprep.subr.mxu0 0.0
    %1546 = vmatpush1.msra.mxu0 %v1476
    %1547 = vmatprep.subr.mxu0 0.0
    %1548 = vmatpush1.msra.mxu0 %v1477
    %1549 = vmatprep.subr.mxu0 0.0
    %1550 = vmatpush1.msra.mxu0 %v1478
    %1551 = vmatprep.subr.mxu0 0.0
    %1552 = vmatpush1.msra.mxu0 %v1479
    %1553 = vmatprep.subr.mxu0 0.0
    %1554 = vmatpush1.msra.mxu0 %v1480
    %1555 = vmatprep.subr.mxu0 0.0
    %1556 = vmatpush1.msra.mxu0 %v1481
    %1557 = vmatprep.subr.mxu0 0.0
    %1558 = vmatpush1.msra.mxu0 %v1482
    %1559 = vmatprep.subr.mxu0 0.0
    %1560 = vmatpush1.msra.mxu0 %v1483
    %1561 = vmatprep.subr.mxu0 0.0
    %1562 = vmatpush1.msra.mxu0 %v1484
    %1563 = vmatprep.subr.mxu0 0.0
    %1564 = vmatpush1.msra.mxu0 %v1485
    %1565 = vmatprep.subr.mxu0 0.0
    %1566 = vmatpush1.msra.mxu0 %v1486
    %1567 = vmatprep.subr.mxu0 0.0
    %1568 = vmatpush1.msra.mxu0 %v1487
    %1569 = vmatprep.subr.mxu0 0.0
    %1570 = vmatpush1.msra.mxu0 %v1488
    %1571 = vmatprep.subr.mxu0 0.0
    %1572 = vmatpush1.msra.mxu0 %v1489
    %1573 = vmatprep.subr.mxu0 0.0
    %1574 = vmatpush1.msra.mxu0 %v1490
    %1575 = vmatprep.subr.mxu0 0.0
    %1576 = vmatpush1.msra.mxu0 %v1491
    %1577 = vmatprep.subr.mxu0 0.0
    %1578 = vmatpush1.msra.mxu0 %v1492
    %1579 = vmatprep.subr.mxu0 0.0
    %1580 = vmatpush1.msra.mxu0 %v1493
    %1581 = vmatprep.subr.mxu0 0.0
    %1582 = vmatpush1.msra.mxu0 %v1494
    %1583 = vmatprep.subr.mxu0 0.0
    %1584 = vmatpush1.msra.mxu0 %v1495
    %1585 = vmatprep.subr.mxu0 0.0
    %1586 = vmatpush1.msra.mxu0 %v1496
    %1587 = vmatprep.subr.mxu0 0.0
    %1588 = vmatpush1.msra.mxu0 %v1497
    %1589 = vmatprep.subr.mxu0 0.0
    %1590 = vmatpush1.msra.mxu0 %v1498
    %1591 = vmatprep.subr.mxu0 0.0
    %1592 = vmatpush1.msra.mxu0 %v1499
    %1593 = vmatprep.subr.mxu0 0.0
    %1594 = vmatpush1.msra.mxu0 %v1500
    %1595 = vmatprep.subr.mxu0 0.0
    %1596 = vmatpush1.msra.mxu0 %v1501
    %1597 = vmatprep.subr.mxu0 0.0
    %1598 = vmatpush1.msra.mxu0 %v1502
    %1599 = vmatprep.mubr.f32.mxu0 %v1426
    %1600 = vmatmul.mubr.f32.gmra.mrb[0].mxu0 %v1424
    %v1601 = vpop.f32.mrb[0].mxu0
    %v1602 = vadd.f32 0.0, %v1601
    %v1603 = vpop.f32.mrb[0].mxu0
    %1604 = vdwg.mxu0
    %1605 = vmatprep.subr.mxu0 0.0
    %1606 = vmatpush1.msra.mxu0 %v1503
    %1607 = vmatprep.subr.mxu0 0.0
    %1608 = vmatpush1.msra.mxu0 %v1504
    %1609 = vmatprep.subr.mxu0 0.0
    %1610 = vmatpush1.msra.mxu0 %v1505
    %1611 = vmatprep.subr.mxu0 0.0
    %1612 = vmatpush1.msra.mxu0 %v1506
    %1613 = vmatprep.subr.mxu0 0.0
    %1614 = vmatpush1.msra.mxu0 %v1507
    %1615 = vmatprep.subr.mxu0 0.0
    %1616 = vmatpush1.msra.mxu0 %v1508
    %1617 = vmatprep.subr.mxu0 0.0
    %1618 = vmatpush1.msra.mxu0 %v1509
    %1619 = vmatprep.subr.mxu0 0.0
    %1620 = vmatpush1.msra.mxu0 %v1510
    %1621 = vmatprep.subr.mxu0 0.0
    %1622 = vmatpush1.msra.mxu0 %v1511
    %1623 = vmatprep.subr.mxu0 0.0
    %1624 = vmatpush1.msra.mxu0 %v1512
    %1625 = vmatprep.subr.mxu0 0.0
    %1626 = vmatpush1.msra.mxu0 %v1513
    %1627 = vmatprep.subr.mxu0 0.0
    %1628 = vmatpush1.msra.mxu0 %v1514
    %1629 = vmatprep.subr.mxu0 0.0
    %1630 = vmatpush1.msra.mxu0 %v1515
    %1631 = vmatprep.subr.mxu0 0.0
    %1632 = vmatpush1.msra.mxu0 %v1516
    %1633 = vmatprep.subr.mxu0 0.0
    %1634 = vmatpush1.msra.mxu0 %v1517
    %1635 = vmatprep.subr.mxu0 0.0
    %1636 = vmatpush1.msra.mxu0 %v1518
    %1637 = vmatprep.subr.mxu0 0.0
    %1638 = vmatpush1.msra.mxu0 %v1519
    %1639 = vmatprep.subr.mxu0 0.0
    %1640 = vmatpush1.msra.mxu0 %v1520
    %1641 = vmatprep.subr.mxu0 0.0
    %1642 = vmatpush1.msra.mxu0 %v1521
    %1643 = vmatprep.subr.mxu0 0.0
    %1644 = vmatpush1.msra.mxu0 %v1522
    %1645 = vmatprep.subr.mxu0 0.0
    %1646 = vmatpush1.msra.mxu0 %v1523
    %1647 = vmatprep.subr.mxu0 0.0
    %1648 = vmatpush1.msra.mxu0 %v1524
    %1649 = vmatprep.subr.mxu0 0.0
    %1650 = vmatpush1.msra.mxu0 %v1525
    %1651 = vmatprep.subr.mxu0 0.0
    %1652 = vmatpush1.msra.mxu0 %v1526
    %1653 = vmatprep.subr.mxu0 0.0
    %1654 = vmatpush1.msra.mxu0 %v1527
    %1655 = vmatprep.subr.mxu0 0.0
    %1656 = vmatpush1.msra.mxu0 %v1528
    %1657 = vmatprep.subr.mxu0 0.0
    %1658 = vmatpush1.msra.mxu0 %v1529
    %1659 = vmatprep.subr.mxu0 0.0
    %1660 = vmatpush1.msra.mxu0 %v1530
    %1661 = vmatprep.subr.mxu0 0.0
    %1662 = vmatpush1.msra.mxu0 %v1531
    %1663 = vmatprep.subr.mxu0 0.0
    %1664 = vmatpush1.msra.mxu0 %v1532
    %1665 = vmatprep.subr.mxu0 0.0
    %1666 = vmatpush1.msra.mxu0 %v1533
    %1667 = vmatprep.subr.mxu0 0.0
    %1668 = vmatpush1.msra.mxu0 %v1534
    %1669 = vmatprep.mubr.f32.mxu0 %v1467
    %1670 = vmatmul.mubr.f32.gmra.mrb[0].mxu0 %v1465
    %v1671 = vpop.f32.mrb[0].mxu0
    %v1672 = vadd.f32 %v1602, %v1671
    %v1673 = vpop.f32.mrb[0].mxu0
    %1674 = vdwg.mxu0
    %1675 = vst [vmem:[#allocation6] sm:$0xff] %v1672
    // Predicated region
    $region78: #{tpu_custom_call.1} parent=1 // pred_check
      _
    $region79: #{tpu_custom_call.1} parent=1 // pred_check_branch
      %1677 = sbr.rel (0) target = $region81
    $region80: #{tpu_custom_call.1} parent=1 // pred_region
      %s1679 = ssub.s32 128, 128
      %1680 = vsyncadd [#allocation5], %s1679
      %s1682 = sshll.u32 [#allocation6], 4
      %s1683 = int_to_ptr.vmem [resolvable:$true] %s1682
      %1685 = dma.vmem_to_hbm [thread:$0]  %s1683, 128, %s18, [#allocation5]
    $region81: #{tpu_custom_call.1} parent=1 // pred_fallthru
      _
    // Predicated region
    $region82: #{tpu_custom_call.1} parent=1 // pred_check
      _
    $region83: #{tpu_custom_call.1} parent=1 // pred_check_branch
      %1687 = sbr.rel (0) target = $region85
    $region84: #{tpu_custom_call.1} parent=1 // pred_region
      %1688 = dma.done [#allocation5], 128
    $region85: #{tpu_custom_call.1} parent=1 // pred_fallthru
      _
    %1689 = vsyncpa [#allocation4], 1
    %1690 = vsyncpa [#allocation5], 1

</llo_original>
